<compile_context>
chip_gen: v5e
topology: v5e:2x2
jax: 0.10.0
libtpu: 0.0.40
codegen_flags: <defaults>
</compile_context>

<pallas_src>
import jax
import jax.numpy as jnp
from jax.experimental import pallas as pl
from jax.experimental.pallas import tpu as pltpu
import numpy as np

CH = 8  # channel dim padded to one sublane tile


# ----------------------------------------------------------------------------
# Pallas kernel: full TCN forward for one batch tile.
#   activations: (CH, N) with N = B_tile * L   (channels on sublanes, b*L+t on lanes)
# ----------------------------------------------------------------------------
def tcn_kernel(x_ref, m_ref, wmat_ref, cols_ref, wlb_ref, o_ref):
    f32 = jnp.float32

    def dot(a, b):
        return jnp.dot(a, b, preferred_element_type=f32)

    def relu(v):
        return jnp.maximum(v, 0.0)

    x = x_ref[...]                       # (1, N)  real input (Cin == 1)
    m1 = m_ref[0:1, :]                   # (1, N)  mask: pos-in-seq >= 1
    m2 = m_ref[1:2, :]                   # (1, N)  mask: pos-in-seq >= 2

    def shift(h, d, mask):
        # causal shift by d along lanes; roll is circular, so zero the first d
        # positions of every sequence (also kills cross-batch wraparound).
        return pltpu.roll(h, shift=d, axis=1) * mask

    def mat(k):                          # k-th packed (8, 8) channel-mix matrix
        return wmat_ref[8 * k:8 * (k + 1), :]

    def col(k):                          # k-th packed (8, 1) column
        return cols_ref[:, k:k + 1]

    w1a0, w1a1, w1d = col(0), col(1), col(2)
    b1a, b1b, b1d = col(3), col(4), col(5)
    b2a, b2b, b2d = col(6), col(7), col(8)
    bl = cols_ref[0:1, 9:10]             # (1, 1) final-linear bias

    w1b0, w1b1 = mat(0), mat(1)
    w2a0, w2a1 = mat(2), mat(3)
    w2b0, w2b1 = mat(4), mat(5)
    w2d = mat(6)

    # ---- TCN block 1 (in=1 -> out=8, dilation=1) ----
    h = relu(w1a0 * shift(x, 1, m1) + w1a1 * x + b1a)          # outer-product conv (8, N)
    h = relu(dot(w1b0, shift(h, 1, m1)) + dot(w1b1, h) + b1b)  # 8->8 conv
    h1 = relu(h + w1d * x + b1d)                               # residual 1x1 (Cin=1)

    # ---- TCN block 2 (in=8 -> out=1, dilation=2) ----
    h = relu(dot(w2a0, shift(h1, 2, m2)) + dot(w2a1, h1) + b2a)
    h = relu(dot(w2b0, shift(h, 2, m2)) + dot(w2b1, h) + b2b)
    h2 = relu(h + dot(w2d, h1) + b2d)                          # (8, N); row 0 is real

    # ---- final Linear(seq_len, 1): block-diagonal matmul -> (1, B_tile) ----
    o_ref[0] = dot(h2[0:1, :], wlb_ref[...]) + bl


# ----------------------------------------------------------------------------
# Wrapper: parameter packing + pallas_call.
# ----------------------------------------------------------------------------
def tcn_pallas(x, p, *, b_tile=None):
    B, c_in, L = x.shape
    assert c_in == 1
    f32 = jnp.float32

    if b_tile is None:
        b_tile = min(B, 8)
    G = pl.cdiv(B, b_tile)
    B_pad = G * b_tile
    N = b_tile * L
    # lane dim of each block must be 128-aligned unless the block spans the array
    assert (N % 128 == 0) or (G == 1)

    # input as (1, B_pad * L): lane index = b * L + t  (free reshape, no channel padding)
    x2 = x.reshape(B, L).astype(f32)
    if B_pad != B:
        x2 = jnp.pad(x2, ((0, B_pad - B), (0, 0)))
    x2 = x2.reshape(1, B_pad * L)

    # causal masks for dilations 1 and 2 (zero first d positions of every sequence)
    t = jnp.arange(L)
    m = jnp.stack([(t >= 1), (t >= 2)]).astype(f32)            # (2, L)
    masks = jnp.tile(m, (1, b_tile))                           # (2, N)

    # packed channel-mixing matrices, each zero-padded to (8, 8), sublane-stacked
    def pad88(w):
        return jnp.zeros((8, 8), f32).at[:w.shape[0], :w.shape[1]].set(w.astype(f32))

    wmat = jnp.concatenate([
        pad88(p['w1b'][:, :, 0]), pad88(p['w1b'][:, :, 1]),
        pad88(p['w2a'][:, :, 0]), pad88(p['w2a'][:, :, 1]),
        pad88(p['w2b'][:, :, 0]), pad88(p['w2b'][:, :, 1]),
        pad88(p['w2d'][:, :, 0]),
    ], axis=0)                                                 # (56, 8)

    # packed column slab: conv-from-1-channel weights, biases, final bias
    def col8(v):
        return jnp.zeros((8,), f32).at[:v.shape[0]].set(v.astype(f32))

    cols = jnp.stack([
        col8(p['w1a'][:, 0, 0]), col8(p['w1a'][:, 0, 1]), col8(p['w1d'][:, 0, 0]),
        col8(p['b1a']), col8(p['b1b']), col8(p['b1d']),
        col8(p['b2a']), col8(p['b2b']), col8(p['b2d']),
        col8(p['bl']),
    ], axis=1)                                                 # (8, 10)

    # block-diagonal final-linear weights: wlb[b*L + t, b] = wl[0, t]
    wlb = jnp.kron(jnp.eye(b_tile, dtype=f32),
                   p['wl'].astype(f32).reshape(L, 1))          # (N, b_tile)

    out = pl.pallas_call(
        tcn_kernel,
        out_shape=jax.ShapeDtypeStruct((G, 1, b_tile), f32),
        grid=(G,),
        in_specs=[
            pl.BlockSpec((1, N), lambda i: (0, i)),            # batch tile of x
            pl.BlockSpec((2, N), lambda i: (0, 0)),            # masks (const)
            pl.BlockSpec((56, 8), lambda i: (0, 0)),           # packed matrices
            pl.BlockSpec((8, 10), lambda i: (0, 0)),           # packed columns
            pl.BlockSpec((N, b_tile), lambda i: (0, 0)),       # block-diag final linear
        ],
        out_specs=pl.BlockSpec((1, 1, b_tile), lambda i: (i, 0, 0)),
        compiler_params=pltpu.CompilerParams(
            dimension_semantics=("parallel",)),
    )(x2, masks, wmat, cols, wlb)

    return out.reshape(B_pad, 1)[:B]                           # (B, 1) == pred[:, :, 0]


# ----------------------------------------------------------------------------
# Deterministic parameter init (shapes from the module's __init__).
# ----------------------------------------------------------------------------
def init_params(key, L):
    ks = jax.random.split(key, 14)

    def u(k, shape, fan):
        bound = float(fan) ** -0.5
        return jax.random.uniform(k, shape, jnp.float32, -bound, bound)

    p = {}
    p['w1a'] = u(ks[0], (8, 1, 2), 1 * 2); p['b1a'] = u(ks[1], (8,), 1 * 2)
    p['w1b'] = u(ks[2], (8, 8, 2), 8 * 2); p['b1b'] = u(ks[3], (8,), 8 * 2)
    p['w1d'] = u(ks[4], (8, 1, 1), 1);     p['b1d'] = u(ks[5], (8,), 1)
    p['w2a'] = u(ks[6], (1, 8, 2), 8 * 2); p['b2a'] = u(ks[7], (1,), 8 * 2)
    p['w2b'] = u(ks[8], (1, 1, 2), 1 * 2); p['b2b'] = u(ks[9], (1,), 1 * 2)
    p['w2d'] = u(ks[10], (1, 8, 1), 8);    p['b2d'] = u(ks[11], (1,), 8)
    p['wl']  = u(ks[12], (1, L), L);       p['bl']  = u(ks[13], (1,), L)
    return p


# ----------------------------------------------------------------------------
# Pure-JAX reference (mirrors PyTorch Conv1d + Chomp + ReLU + residual + Linear)
# ----------------------------------------------------------------------------
def causal_conv1d_ref(x, w, b, dilation):
    B, Cin, L = x.shape
    Cout, _, K = w.shape
    pad = (K - 1) * dilation
    xp = jnp.pad(x, ((0, 0), (0, 0), (pad, 0)))
    y = jnp.zeros((B, Cout, L), jnp.float32)
    for k in range(K):
        xk = xp[:, :, k * dilation: k * dilation + L]
        y = y + jnp.einsum('oi,bil->bol', w[:, :, k], xk)
    return y + b[None, :, None]


def tcn_ref(x, p):
    relu = jax.nn.relu
    h = relu(causal_conv1d_ref(x, p['w1a'], p['b1a'], 1))
    h = relu(causal_conv1d_ref(h, p['w1b'], p['b1b'], 1))
    h1 = relu(h + causal_conv1d_ref(x, p['w1d'], p['b1d'], 1))
    h = relu(causal_conv1d_ref(h1, p['w2a'], p['b2a'], 2))
    h = relu(causal_conv1d_ref(h, p['w2b'], p['b2b'], 2))
    h2 = relu(h + causal_conv1d_ref(h1, p['w2d'], p['b2d'], 1))   # (B, 1, L)
    out = jnp.einsum('bcl,ol->bco', h2, p['wl']) + p['bl']        # (B, 1, 1)
    return out[:, :, 0]                                           # (B, 1)


if __name__ == "__main__":
    # TODO(synk): dropout (p=0.2) is stochastic-training-only; forward here is eval-mode identity.
    B, L = 8, 128        # configs.seq_len = 128, num_inputs = 1
    key = jax.random.PRNGKey(0)
    kx, kp = jax.random.split(key)
    x = jax.random.normal(kx, (B, 1, L), jnp.float32)
    params = init_params(kp, L)

    pred = tcn_pallas(x, params)
    jax.block_until_ready(pred)

    ref = tcn_ref(x, params)
    np.testing.assert_allclose(np.asarray(pred), np.asarray(ref),
                               rtol=2e-2, atol=2e-2)
    assert pred.shape == (B, 1)
    print("KERNEL_OK")
</pallas_src>

<mosaic_0001>
module attributes {stable_mosaic.version = 11 : i64} {
  func.func @tcn_kernel(%arg0: i32, %arg1: memref<1x1024xf32, #tpu.memory_space<vmem>>, %arg2: memref<2x1024xf32, #tpu.memory_space<vmem>>, %arg3: memref<56x8xf32, #tpu.memory_space<vmem>>, %arg4: memref<8x10xf32, #tpu.memory_space<vmem>>, %arg5: memref<1024x8xf32, #tpu.memory_space<vmem>>, %arg6: memref<1x1x8xf32, #tpu.memory_space<vmem>>) attributes {dimension_semantics = [#tpu.dimension_semantics<parallel>], iteration_bounds = array<i64: 1>, scalar_prefetch = 0 : i64, scratch_operands = 0 : i64, tpu.core_type = #tpu.core_type<tc>, window_params = [{transform_indices = @transform_0, window_bounds = array<i64: 1, 1024>}, {pipeline_mode = #tpu.pipeline_mode<synchronous>, transform_indices = @transform_1, window_bounds = array<i64: 2, 1024>}, {pipeline_mode = #tpu.pipeline_mode<synchronous>, transform_indices = @transform_2, window_bounds = array<i64: 56, 8>}, {pipeline_mode = #tpu.pipeline_mode<synchronous>, transform_indices = @transform_3, window_bounds = array<i64: 8, 10>}, {pipeline_mode = #tpu.pipeline_mode<synchronous>, transform_indices = @transform_4, window_bounds = array<i64: 1024, 8>}, {transform_indices = @transform_5, window_bounds = array<i64: 1, 1, 8>}]} {
    %c0 = arith.constant 0 : index
    %c0_0 = arith.constant 0 : index
    %0 = vector.load %arg1[%c0, %c0_0] : memref<1x1024xf32, #tpu.memory_space<vmem>>, vector<1x1024xf32>
    %c0_1 = arith.constant 0 : index
    %c0_2 = arith.constant 0 : index
    %1 = vector.load %arg2[%c0_1, %c0_2] : memref<2x1024xf32, #tpu.memory_space<vmem>>, vector<1x1024xf32>
    %c1 = arith.constant 1 : index
    %c0_3 = arith.constant 0 : index
    %2 = vector.load %arg2[%c1, %c0_3] : memref<2x1024xf32, #tpu.memory_space<vmem>>, vector<1x1024xf32>
    %c0_4 = arith.constant 0 : index
    %c0_5 = arith.constant 0 : index
    %3 = vector.load %arg4[%c0_4, %c0_5] : memref<8x10xf32, #tpu.memory_space<vmem>>, vector<8x1xf32>
    %c0_6 = arith.constant 0 : index
    %c1_7 = arith.constant 1 : index
    %4 = vector.load %arg4[%c0_6, %c1_7] : memref<8x10xf32, #tpu.memory_space<vmem>>, vector<8x1xf32>
    %c0_8 = arith.constant 0 : index
    %c2 = arith.constant 2 : index
    %5 = vector.load %arg4[%c0_8, %c2] : memref<8x10xf32, #tpu.memory_space<vmem>>, vector<8x1xf32>
    %c0_9 = arith.constant 0 : index
    %c3 = arith.constant 3 : index
    %6 = vector.load %arg4[%c0_9, %c3] : memref<8x10xf32, #tpu.memory_space<vmem>>, vector<8x1xf32>
    %c0_10 = arith.constant 0 : index
    %c4 = arith.constant 4 : index
    %7 = vector.load %arg4[%c0_10, %c4] : memref<8x10xf32, #tpu.memory_space<vmem>>, vector<8x1xf32>
    %c0_11 = arith.constant 0 : index
    %c5 = arith.constant 5 : index
    %8 = vector.load %arg4[%c0_11, %c5] : memref<8x10xf32, #tpu.memory_space<vmem>>, vector<8x1xf32>
    %c0_12 = arith.constant 0 : index
    %c6 = arith.constant 6 : index
    %9 = vector.load %arg4[%c0_12, %c6] : memref<8x10xf32, #tpu.memory_space<vmem>>, vector<8x1xf32>
    %c0_13 = arith.constant 0 : index
    %c7 = arith.constant 7 : index
    %10 = vector.load %arg4[%c0_13, %c7] : memref<8x10xf32, #tpu.memory_space<vmem>>, vector<8x1xf32>
    %c0_14 = arith.constant 0 : index
    %c8 = arith.constant 8 : index
    %11 = vector.load %arg4[%c0_14, %c8] : memref<8x10xf32, #tpu.memory_space<vmem>>, vector<8x1xf32>
    %c0_15 = arith.constant 0 : index
    %c9 = arith.constant 9 : index
    %12 = vector.load %arg4[%c0_15, %c9] : memref<8x10xf32, #tpu.memory_space<vmem>>, vector<1x1xf32>
    %c0_16 = arith.constant 0 : index
    %c0_17 = arith.constant 0 : index
    %13 = vector.load %arg3[%c0_16, %c0_17] : memref<56x8xf32, #tpu.memory_space<vmem>>, vector<8x8xf32>
    %c8_18 = arith.constant 8 : index
    %c0_19 = arith.constant 0 : index
    %14 = vector.load %arg3[%c8_18, %c0_19] : memref<56x8xf32, #tpu.memory_space<vmem>>, vector<8x8xf32>
    %c16 = arith.constant 16 : index
    %c0_20 = arith.constant 0 : index
    %15 = vector.load %arg3[%c16, %c0_20] : memref<56x8xf32, #tpu.memory_space<vmem>>, vector<8x8xf32>
    %c24 = arith.constant 24 : index
    %c0_21 = arith.constant 0 : index
    %16 = vector.load %arg3[%c24, %c0_21] : memref<56x8xf32, #tpu.memory_space<vmem>>, vector<8x8xf32>
    %c32 = arith.constant 32 : index
    %c0_22 = arith.constant 0 : index
    %17 = vector.load %arg3[%c32, %c0_22] : memref<56x8xf32, #tpu.memory_space<vmem>>, vector<8x8xf32>
    %c40 = arith.constant 40 : index
    %c0_23 = arith.constant 0 : index
    %18 = vector.load %arg3[%c40, %c0_23] : memref<56x8xf32, #tpu.memory_space<vmem>>, vector<8x8xf32>
    %c48 = arith.constant 48 : index
    %c0_24 = arith.constant 0 : index
    %19 = vector.load %arg3[%c48, %c0_24] : memref<56x8xf32, #tpu.memory_space<vmem>>, vector<8x8xf32>
    %c1_i32 = arith.constant 1 : i32
    %20 = tpu.dynamic_rotate %0 by %c1_i32 dim 1 : vector<1x1024xf32>, i32 -> vector<1x1024xf32>
    %21 = arith.mulf %20, %1 : vector<1x1024xf32>
    %22 = vector.broadcast %3 : vector<8x1xf32> to vector<8x1024xf32>
    %23 = vector.broadcast %21 : vector<1x1024xf32> to vector<8x1024xf32>
    %24 = arith.mulf %22, %23 : vector<8x1024xf32>
    %25 = vector.broadcast %4 : vector<8x1xf32> to vector<8x1024xf32>
    %26 = vector.broadcast %0 : vector<1x1024xf32> to vector<8x1024xf32>
    %27 = arith.mulf %25, %26 : vector<8x1024xf32>
    %28 = arith.addf %24, %27 : vector<8x1024xf32>
    %29 = vector.broadcast %6 : vector<8x1xf32> to vector<8x1024xf32>
    %30 = arith.addf %28, %29 : vector<8x1024xf32>
    %cst = arith.constant 0.000000e+00 : f32
    %31 = vector.broadcast %cst : f32 to vector<8x1024xf32>
    %32 = arith.maximumf %30, %31 : vector<8x1024xf32>
    %c1_i32_25 = arith.constant 1 : i32
    %33 = tpu.dynamic_rotate %32 by %c1_i32_25 dim 1 : vector<8x1024xf32>, i32 -> vector<8x1024xf32>
    %34 = vector.broadcast %1 : vector<1x1024xf32> to vector<8x1024xf32>
    %35 = arith.mulf %33, %34 : vector<8x1024xf32>
    %cst_26 = arith.constant dense<0.000000e+00> : vector<8x1024xf32>
    %36 = tpu.matmul %13, %35, %cst_26 {dimension_numbers = #tpu.dot_dimension_numbers<[1], [0], [0], [1], [0, 0, 1, 1], [], []>} : vector<8x8xf32>, vector<8x1024xf32>, vector<8x1024xf32> -> vector<8x1024xf32>
    %cst_27 = arith.constant dense<0.000000e+00> : vector<8x1024xf32>
    %37 = tpu.matmul %14, %32, %cst_27 {dimension_numbers = #tpu.dot_dimension_numbers<[1], [0], [0], [1], [0, 0, 1, 1], [], []>} : vector<8x8xf32>, vector<8x1024xf32>, vector<8x1024xf32> -> vector<8x1024xf32>
    %38 = arith.addf %36, %37 : vector<8x1024xf32>
    %39 = vector.broadcast %7 : vector<8x1xf32> to vector<8x1024xf32>
    %40 = arith.addf %38, %39 : vector<8x1024xf32>
    %cst_28 = arith.constant 0.000000e+00 : f32
    %41 = vector.broadcast %cst_28 : f32 to vector<8x1024xf32>
    %42 = arith.maximumf %40, %41 : vector<8x1024xf32>
    %43 = vector.broadcast %5 : vector<8x1xf32> to vector<8x1024xf32>
    %44 = vector.broadcast %0 : vector<1x1024xf32> to vector<8x1024xf32>
    %45 = arith.mulf %43, %44 : vector<8x1024xf32>
    %46 = arith.addf %42, %45 : vector<8x1024xf32>
    %47 = vector.broadcast %8 : vector<8x1xf32> to vector<8x1024xf32>
    %48 = arith.addf %46, %47 : vector<8x1024xf32>
    %cst_29 = arith.constant 0.000000e+00 : f32
    %49 = vector.broadcast %cst_29 : f32 to vector<8x1024xf32>
    %50 = arith.maximumf %48, %49 : vector<8x1024xf32>
    %c2_i32 = arith.constant 2 : i32
    %51 = tpu.dynamic_rotate %50 by %c2_i32 dim 1 : vector<8x1024xf32>, i32 -> vector<8x1024xf32>
    %52 = vector.broadcast %2 : vector<1x1024xf32> to vector<8x1024xf32>
    %53 = arith.mulf %51, %52 : vector<8x1024xf32>
    %cst_30 = arith.constant dense<0.000000e+00> : vector<8x1024xf32>
    %54 = tpu.matmul %15, %53, %cst_30 {dimension_numbers = #tpu.dot_dimension_numbers<[1], [0], [0], [1], [0, 0, 1, 1], [], []>} : vector<8x8xf32>, vector<8x1024xf32>, vector<8x1024xf32> -> vector<8x1024xf32>
    %cst_31 = arith.constant dense<0.000000e+00> : vector<8x1024xf32>
    %55 = tpu.matmul %16, %50, %cst_31 {dimension_numbers = #tpu.dot_dimension_numbers<[1], [0], [0], [1], [0, 0, 1, 1], [], []>} : vector<8x8xf32>, vector<8x1024xf32>, vector<8x1024xf32> -> vector<8x1024xf32>
    %56 = arith.addf %54, %55 : vector<8x1024xf32>
    %57 = vector.broadcast %9 : vector<8x1xf32> to vector<8x1024xf32>
    %58 = arith.addf %56, %57 : vector<8x1024xf32>
    %cst_32 = arith.constant 0.000000e+00 : f32
    %59 = vector.broadcast %cst_32 : f32 to vector<8x1024xf32>
    %60 = arith.maximumf %58, %59 : vector<8x1024xf32>
    %c2_i32_33 = arith.constant 2 : i32
    %61 = tpu.dynamic_rotate %60 by %c2_i32_33 dim 1 : vector<8x1024xf32>, i32 -> vector<8x1024xf32>
    %62 = vector.broadcast %2 : vector<1x1024xf32> to vector<8x1024xf32>
    %63 = arith.mulf %61, %62 : vector<8x1024xf32>
    %cst_34 = arith.constant dense<0.000000e+00> : vector<8x1024xf32>
    %64 = tpu.matmul %17, %63, %cst_34 {dimension_numbers = #tpu.dot_dimension_numbers<[1], [0], [0], [1], [0, 0, 1, 1], [], []>} : vector<8x8xf32>, vector<8x1024xf32>, vector<8x1024xf32> -> vector<8x1024xf32>
    %cst_35 = arith.constant dense<0.000000e+00> : vector<8x1024xf32>
    %65 = tpu.matmul %18, %60, %cst_35 {dimension_numbers = #tpu.dot_dimension_numbers<[1], [0], [0], [1], [0, 0, 1, 1], [], []>} : vector<8x8xf32>, vector<8x1024xf32>, vector<8x1024xf32> -> vector<8x1024xf32>
    %66 = arith.addf %64, %65 : vector<8x1024xf32>
    %67 = vector.broadcast %10 : vector<8x1xf32> to vector<8x1024xf32>
    %68 = arith.addf %66, %67 : vector<8x1024xf32>
    %cst_36 = arith.constant 0.000000e+00 : f32
    %69 = vector.broadcast %cst_36 : f32 to vector<8x1024xf32>
    %70 = arith.maximumf %68, %69 : vector<8x1024xf32>
    %cst_37 = arith.constant dense<0.000000e+00> : vector<8x1024xf32>
    %71 = tpu.matmul %19, %50, %cst_37 {dimension_numbers = #tpu.dot_dimension_numbers<[1], [0], [0], [1], [0, 0, 1, 1], [], []>} : vector<8x8xf32>, vector<8x1024xf32>, vector<8x1024xf32> -> vector<8x1024xf32>
    %72 = arith.addf %70, %71 : vector<8x1024xf32>
    %73 = vector.broadcast %11 : vector<8x1xf32> to vector<8x1024xf32>
    %74 = arith.addf %72, %73 : vector<8x1024xf32>
    %cst_38 = arith.constant 0.000000e+00 : f32
    %75 = vector.broadcast %cst_38 : f32 to vector<8x1024xf32>
    %76 = arith.maximumf %74, %75 : vector<8x1024xf32>
    %77 = vector.extract_strided_slice %76 {offsets = [0, 0], sizes = [1, 1024], strides = [1, 1]} : vector<8x1024xf32> to vector<1x1024xf32>
    %c0_39 = arith.constant 0 : index
    %c0_40 = arith.constant 0 : index
    %78 = vector.load %arg5[%c0_39, %c0_40] : memref<1024x8xf32, #tpu.memory_space<vmem>>, vector<1024x8xf32>
    %cst_41 = arith.constant dense<0.000000e+00> : vector<1x8xf32>
    %79 = tpu.matmul %77, %78, %cst_41 {dimension_numbers = #tpu.dot_dimension_numbers<[1], [0], [0], [1], [0, 0, 1, 1], [], []>} : vector<1x1024xf32>, vector<1024x8xf32>, vector<1x8xf32> -> vector<1x8xf32>
    %80 = vector.broadcast %12 : vector<1x1xf32> to vector<1x8xf32>
    %81 = arith.addf %79, %80 : vector<1x8xf32>
    %c0_42 = arith.constant 0 : index
    %c0_43 = arith.constant 0 : index
    %c0_44 = arith.constant 0 : index
    %82 = vector.load %arg6[%c0_42, %c0_43, %c0_44] : memref<1x1x8xf32, #tpu.memory_space<vmem>>, vector<1x1x8xf32>
    %83 = vector.shape_cast %82 : vector<1x1x8xf32> to vector<1x8xf32>
    %84 = vector.shape_cast %81 : vector<1x8xf32> to vector<1x1x8xf32>
    tpu.vector_store %arg6[%c0_42, %c0_43, %c0_44], %84 {strides = array<i32>} : memref<1x1x8xf32, #tpu.memory_space<vmem>>, vector<1x1x8xf32>,
    return
  }
  func.func @transform_0(%arg0: i32) -> (i32, i32) {
    %c0_i32 = arith.constant 0 : i32
    %c0_i32_0 = arith.constant 0 : i32
    return %c0_i32, %arg0 : i32, i32
  }
  func.func @transform_1(%arg0: i32) -> (i32, i32) {
    %c0_i32 = arith.constant 0 : i32
    %c0_i32_0 = arith.constant 0 : i32
    %c0_i32_1 = arith.constant 0 : i32
    return %c0_i32, %c0_i32_0 : i32, i32
  }
  func.func @transform_2(%arg0: i32) -> (i32, i32) {
    %c0_i32 = arith.constant 0 : i32
    %c0_i32_0 = arith.constant 0 : i32
    %c0_i32_1 = arith.constant 0 : i32
    return %c0_i32, %c0_i32_0 : i32, i32
  }
  func.func @transform_3(%arg0: i32) -> (i32, i32) {
    %c0_i32 = arith.constant 0 : i32
    %c0_i32_0 = arith.constant 0 : i32
    %c0_i32_1 = arith.constant 0 : i32
    return %c0_i32, %c0_i32_0 : i32, i32
  }
  func.func @transform_4(%arg0: i32) -> (i32, i32) {
    %c0_i32 = arith.constant 0 : i32
    %c0_i32_0 = arith.constant 0 : i32
    %c0_i32_1 = arith.constant 0 : i32
    return %c0_i32, %c0_i32_0 : i32, i32
  }
  func.func @transform_5(%arg0: i32) -> (i32, i32, i32) {
    %c0_i32 = arith.constant 0 : i32
    %c0_i32_0 = arith.constant 0 : i32
    %c0_i32_1 = arith.constant 0 : i32
    return %arg0, %c0_i32, %c0_i32_0 : i32, i32, i32
  }
}

</mosaic_0001>

<llo_original>
// kernel: tpu_custom_call.1
$region0: #{tpu_custom_call.1}
  #allocation0 [shape = 'u32[]', space=smem, size = 0x4, offset = 0x4, fixed_abs, tag = 'smem constant byte address 0x4 - core index']
  #allocation1 [shape = 'u32[72,128]{1,0:T(1,128)}', space=vmem, size = 0x9000, scoped, tag = 'internal scratch']
  %s0 = inlined_call_operand.vmem [shape: f32[1,1024], index: 0, kind: input, shape index: {}]
  %s1 = inlined_call_operand.vmem [shape: f32[2,1024], index: 1, kind: input, shape index: {}]
  %s2 = inlined_call_operand.vmem [shape: f32[56,8], index: 2, kind: input, shape index: {}]
  %s3 = inlined_call_operand.vmem [shape: f32[8,10], index: 3, kind: input, shape index: {}]
  %s4 = inlined_call_operand.vmem [shape: f32[1024,8], index: 4, kind: input, shape index: {}]
  %s5 = inlined_call_operand.hbm [shape: f32[1,1,8], index: 5, kind: output, shape index: {}]
  %s6 = sld [smem:[#allocation0]]
  $region30: #{tpu_custom_call.1} parent=0
    _
  %s8 = ssub.s32 1, %s6
  %s9 = scalar_select 0, %s8, %s6
  $region1: #{tpu_custom_call.1} parent=0
    #allocation2 [shape = 'u8[512]{0}', space=vmem, size = 0x400, scoped, tag = 'output window, operand 0, single buffered']
    #allocation3 [shape = 's32[1]{0}', space=sflag, size = 0x4, scoped, tag = 'scoped memory for tpu_custom_call.1']
    %10 = vsyncpa [#allocation3], 0
    // Predicated region
    $region2: #{tpu_custom_call.1} parent=1 // pred_check
      _
    $region3: #{tpu_custom_call.1} parent=1 // pred_check_branch
      %12 = sbr.rel (0) target = $region5
    $region4: #{tpu_custom_call.1} parent=1 // pred_region
      _
    $region5: #{tpu_custom_call.1} parent=1 // pred_fallthru
      _
    // Predicated region
    $region6: #{tpu_custom_call.1} parent=1 // pred_check
      _
    $region7: #{tpu_custom_call.1} parent=1 // pred_check_branch
      %14 = sbr.rel (0) target = $region9
    $region8: #{tpu_custom_call.1} parent=1 // pred_region
      _
    $region9: #{tpu_custom_call.1} parent=1 // pred_fallthru
      _
    // Predicated region
    $region10: #{tpu_custom_call.1} parent=1 // pred_check
      _
    $region11: #{tpu_custom_call.1} parent=1 // pred_check_branch
      %16 = sbr.rel (0) target = $region13
    $region12: #{tpu_custom_call.1} parent=1 // pred_region
      _
    $region13: #{tpu_custom_call.1} parent=1 // pred_fallthru
      _
    // Predicated region
    $region14: #{tpu_custom_call.1} parent=1 // pred_check
      _
    $region15: #{tpu_custom_call.1} parent=1 // pred_check_branch
      %18 = sbr.rel (0) target = $region17
    $region16: #{tpu_custom_call.1} parent=1 // pred_region
      _
    $region17: #{tpu_custom_call.1} parent=1 // pred_fallthru
      _
    // Predicated region
    $region18: #{tpu_custom_call.1} parent=1 // pred_check
      _
    $region19: #{tpu_custom_call.1} parent=1 // pred_check_branch
      %20 = sbr.rel (0) target = $region21
    $region20: #{tpu_custom_call.1} parent=1 // pred_region
      _
    $region21: #{tpu_custom_call.1} parent=1 // pred_fallthru
      _
    %v21 = vld [vmem:[%s0] sm:$0xff]
    %v22 = vld [vmem:[%s1] ss:$2 sm:$0xff]
    %s23 = scalar_lea.vmem %s1, 1
    %v24 = vld [vmem:[%s23] ss:$2 sm:$0xff]
    %v25 = vld [vmem:[%s3] sm:$0xff]
    %v26 = vld [vmem:[%s3] sm:$0x1]
    %v27 = vld [vmem:[%s2] sm:$0xff]
    %v28 = vld [vmem:[%s2 + $0x8] sm:$0xff]
    %v29 = vld [vmem:[%s2 + $0x10] sm:$0xff]
    %v30 = vld [vmem:[%s2 + $0x18] sm:$0xff]
    %v31 = vld [vmem:[%s2 + $0x20] sm:$0xff]
    %v32 = vld [vmem:[%s2 + $0x28] sm:$0xff]
    %v33 = vld [vmem:[%s2 + $0x30] sm:$0xff]
    %v35 = vperm.slane %v21, 0
    %v36 = vperm.slane %v21, 1
    %v37 = vperm.slane %v21, 2
    %v38 = vperm.slane %v21, 3
    %v39 = vperm.slane %v21, 4
    %v40 = vperm.slane %v21, 5
    %v41 = vperm.slane %v21, 6
    %v42 = vperm.slane %v21, 7
    %51 = vrot.lane.b32.xlu0 %v35, 1
    %v52 = vpop.permute.xlu0 %51
    %53 = vrot.lane.b32.xlu0 %v36, 1
    %v54 = vpop.permute.xlu0 %53
    %55 = vrot.lane.b32.xlu0 %v37, 1
    %v56 = vpop.permute.xlu0 %55
    %57 = vrot.lane.b32.xlu0 %v38, 1
    %v58 = vpop.permute.xlu0 %57
    %59 = vrot.lane.b32.xlu0 %v39, 1
    %v60 = vpop.permute.xlu0 %59
    %61 = vrot.lane.b32.xlu0 %v40, 1
    %v62 = vpop.permute.xlu0 %61
    %63 = vrot.lane.b32.xlu0 %v41, 1
    %v64 = vpop.permute.xlu0 %63
    %65 = vrot.lane.b32.xlu0 %v42, 1
    %v66 = vpop.permute.xlu0 %65
    %v67 = vlaneseq
    %v68 = vand.u32 %v67, 127
    %vm69 = vcmp.lt.s32.totalorder %v68, 1
    %v70 = vsel %vm69, %v64, %v66
    %v71 = vsel %vm69, %v62, %v64
    %v72 = vsel %vm69, %v60, %v62
    %v73 = vsel %vm69, %v58, %v60
    %v74 = vsel %vm69, %v56, %v58
    %v75 = vsel %vm69, %v54, %v56
    %v76 = vsel %vm69, %v52, %v54
    %v77 = vsel %vm69, %v66, %v52
    %v79 = vperm.slane %v22, 0
    %v80 = vperm.slane %v22, 1
    %v81 = vperm.slane %v22, 2
    %v82 = vperm.slane %v22, 3
    %v83 = vperm.slane %v22, 4
    %v84 = vperm.slane %v22, 5
    %v85 = vperm.slane %v22, 6
    %v86 = vperm.slane %v22, 7
    %v95 = vmul.f32 %v77, %v79
    %v96 = vmul.f32 %v76, %v80
    %v97 = vmul.f32 %v75, %v81
    %v98 = vmul.f32 %v74, %v82
    %v99 = vmul.f32 %v73, %v83
    %v100 = vmul.f32 %v72, %v84
    %v101 = vmul.f32 %v71, %v85
    %v102 = vmul.f32 %v70, %v86
    %104 = vset.pattern.permute.xlu0 0
    %105 = vperm.xlu0 %104, %v25
    %v106 = vpop.permute.xlu0 %105
    %v108 = vperm.slane %v95, 0
    %v109 = vperm.slane %v96, 0
    %v110 = vperm.slane %v97, 0
    %v111 = vperm.slane %v98, 0
    %v112 = vperm.slane %v99, 0
    %v113 = vperm.slane %v100, 0
    %v114 = vperm.slane %v101, 0
    %v115 = vperm.slane %v102, 0
    %v116 = vmul.f32 %v106, %v108
    %v117 = vmul.f32 %v106, %v109
    %v118 = vmul.f32 %v106, %v110
    %v119 = vmul.f32 %v106, %v111
    %v120 = vmul.f32 %v106, %v112
    %v121 = vmul.f32 %v106, %v113
    %v122 = vmul.f32 %v106, %v114
    %v123 = vmul.f32 %v106, %v115
    %124 = vset.pattern.permute.xlu0 1
    %125 = vperm.xlu0 %124, %v25
    %v126 = vpop.permute.xlu0 %125
    %v128 = vmul.f32 %v126, %v35
    %v129 = vmul.f32 %v126, %v36
    %v130 = vmul.f32 %v126, %v37
    %v131 = vmul.f32 %v126, %v38
    %v132 = vmul.f32 %v126, %v39
    %v133 = vmul.f32 %v126, %v40
    %v134 = vmul.f32 %v126, %v41
    %v135 = vmul.f32 %v126, %v42
    %v136 = vadd.f32 %v116, %v128
    %v137 = vadd.f32 %v117, %v129
    %v138 = vadd.f32 %v118, %v130
    %v139 = vadd.f32 %v119, %v131
    %v140 = vadd.f32 %v120, %v132
    %v141 = vadd.f32 %v121, %v133
    %v142 = vadd.f32 %v122, %v134
    %v143 = vadd.f32 %v123, %v135
    %144 = vset.pattern.permute.xlu0 3
    %145 = vperm.xlu0 %144, %v25
    %v146 = vpop.permute.xlu0 %145
    %v148 = vadd.f32 %v136, %v146
    %v149 = vadd.f32 %v137, %v146
    %v150 = vadd.f32 %v138, %v146
    %v151 = vadd.f32 %v139, %v146
    %v152 = vadd.f32 %v140, %v146
    %v153 = vadd.f32 %v141, %v146
    %v154 = vadd.f32 %v142, %v146
    %v155 = vadd.f32 %v143, %v146
    %v156 = vmax.f32 %v148, 0.0
    %v157 = vmax.f32 %v149, 0.0
    %v158 = vmax.f32 %v150, 0.0
    %v159 = vmax.f32 %v151, 0.0
    %v160 = vmax.f32 %v152, 0.0
    %v161 = vmax.f32 %v153, 0.0
    %v162 = vmax.f32 %v154, 0.0
    %v163 = vmax.f32 %v155, 0.0
    %164 = vrot.lane.b32.xlu0 %v156, 1
    %v165 = vpop.permute.xlu0 %164
    %166 = vrot.lane.b32.xlu0 %v157, 1
    %v167 = vpop.permute.xlu0 %166
    %168 = vrot.lane.b32.xlu0 %v158, 1
    %v169 = vpop.permute.xlu0 %168
    %170 = vrot.lane.b32.xlu0 %v159, 1
    %v171 = vpop.permute.xlu0 %170
    %172 = vrot.lane.b32.xlu0 %v160, 1
    %v173 = vpop.permute.xlu0 %172
    %174 = vrot.lane.b32.xlu0 %v161, 1
    %v175 = vpop.permute.xlu0 %174
    %176 = vrot.lane.b32.xlu0 %v162, 1
    %v177 = vpop.permute.xlu0 %176
    %178 = vrot.lane.b32.xlu0 %v163, 1
    %v179 = vpop.permute.xlu0 %178
    %v180 = vsel %vm69, %v177, %v179
    %v181 = vsel %vm69, %v175, %v177
    %v182 = vsel %vm69, %v173, %v175
    %v183 = vsel %vm69, %v171, %v173
    %v184 = vsel %vm69, %v169, %v171
    %v185 = vsel %vm69, %v167, %v169
    %v186 = vsel %vm69, %v165, %v167
    %v187 = vsel %vm69, %v179, %v165
    %v188 = vmul.f32 %v187, %v79
    %v189 = vmul.f32 %v186, %v80
    %v190 = vmul.f32 %v185, %v81
    %v191 = vmul.f32 %v184, %v82
    %v192 = vmul.f32 %v183, %v83
    %v193 = vmul.f32 %v182, %v84
    %v194 = vmul.f32 %v181, %v85
    %v195 = vmul.f32 %v180, %v86
    %vm196 = vcmask 64512
    %v198 = vsel %vm196, %v28, 0
    %200 = vmatpush.msra.mxu0 0.0
    %201 = vmatpush.msra.mxu0 0.0
    %202 = vmatpush.msra.mxu0 0.0
    %203 = vmatpush.msra.mxu0 0.0
    %204 = vmatpush.msra.mxu0 0.0
    %205 = vmatpush.msra.mxu0 0.0
    %206 = vmatpush.msra.mxu0 0.0
    %207 = vmatpush.msra.mxu0 0.0
    %208 = vmatpush.msra.mxu0 0.0
    %209 = vmatpush.msra.mxu0 0.0
    %210 = vmatpush.msra.mxu0 0.0
    %211 = vmatpush.msra.mxu0 0.0
    %212 = vmatpush.msra.mxu0 0.0
    %213 = vmatpush.msra.mxu0 0.0
    %214 = vmatpush.msra.mxu0 0.0
    %215 = vmatpush.msra.mxu0 %v156
    %216 = vmatmul.f32.gmra.mxu0 %v198
    %v217 = vpop.f32.mrf.mxu0
    %v218 = vadd.f32 0.0, %v217
    %219 = vdwg.mxu0
    %220 = vmatpush.msra.mxu0 0.0
    %221 = vmatpush.msra.mxu0 0.0
    %222 = vmatpush.msra.mxu0 0.0
    %223 = vmatpush.msra.mxu0 0.0
    %224 = vmatpush.msra.mxu0 0.0
    %225 = vmatpush.msra.mxu0 0.0
    %226 = vmatpush.msra.mxu0 0.0
    %227 = vmatpush.msra.mxu0 0.0
    %228 = vmatpush.msra.mxu0 0.0
    %229 = vmatpush.msra.mxu0 0.0
    %230 = vmatpush.msra.mxu0 0.0
    %231 = vmatpush.msra.mxu0 0.0
    %232 = vmatpush.msra.mxu0 0.0
    %233 = vmatpush.msra.mxu0 0.0
    %234 = vmatpush.msra.mxu0 0.0
    %235 = vmatpush.msra.mxu0 %v157
    %236 = vmatmul.f32.gmra.mxu0 %v198
    %v237 = vpop.f32.mrf.mxu0
    %v238 = vadd.f32 0.0, %v237
    %239 = vdwg.mxu0
    %240 = vmatpush.msra.mxu0 0.0
    %241 = vmatpush.msra.mxu0 0.0
    %242 = vmatpush.msra.mxu0 0.0
    %243 = vmatpush.msra.mxu0 0.0
    %244 = vmatpush.msra.mxu0 0.0
    %245 = vmatpush.msra.mxu0 0.0
    %246 = vmatpush.msra.mxu0 0.0
    %247 = vmatpush.msra.mxu0 0.0
    %248 = vmatpush.msra.mxu0 0.0
    %249 = vmatpush.msra.mxu0 0.0
    %250 = vmatpush.msra.mxu0 0.0
    %251 = vmatpush.msra.mxu0 0.0
    %252 = vmatpush.msra.mxu0 0.0
    %253 = vmatpush.msra.mxu0 0.0
    %254 = vmatpush.msra.mxu0 0.0
    %255 = vmatpush.msra.mxu0 %v158
    %256 = vmatmul.f32.gmra.mxu0 %v198
    %v257 = vpop.f32.mrf.mxu0
    %v258 = vadd.f32 0.0, %v257
    %259 = vdwg.mxu0
    %260 = vmatpush.msra.mxu0 0.0
    %261 = vmatpush.msra.mxu0 0.0
    %262 = vmatpush.msra.mxu0 0.0
    %263 = vmatpush.msra.mxu0 0.0
    %264 = vmatpush.msra.mxu0 0.0
    %265 = vmatpush.msra.mxu0 0.0
    %266 = vmatpush.msra.mxu0 0.0
    %267 = vmatpush.msra.mxu0 0.0
    %268 = vmatpush.msra.mxu0 0.0
    %269 = vmatpush.msra.mxu0 0.0
    %270 = vmatpush.msra.mxu0 0.0
    %271 = vmatpush.msra.mxu0 0.0
    %272 = vmatpush.msra.mxu0 0.0
    %273 = vmatpush.msra.mxu0 0.0
    %274 = vmatpush.msra.mxu0 0.0
    %275 = vmatpush.msra.mxu0 %v159
    %276 = vmatmul.f32.gmra.mxu0 %v198
    %v277 = vpop.f32.mrf.mxu0
    %v278 = vadd.f32 0.0, %v277
    %279 = vdwg.mxu0
    %280 = vmatpush.msra.mxu0 0.0
    %281 = vmatpush.msra.mxu0 0.0
    %282 = vmatpush.msra.mxu0 0.0
    %283 = vmatpush.msra.mxu0 0.0
    %284 = vmatpush.msra.mxu0 0.0
    %285 = vmatpush.msra.mxu0 0.0
    %286 = vmatpush.msra.mxu0 0.0
    %287 = vmatpush.msra.mxu0 0.0
    %288 = vmatpush.msra.mxu0 0.0
    %289 = vmatpush.msra.mxu0 0.0
    %290 = vmatpush.msra.mxu0 0.0
    %291 = vmatpush.msra.mxu0 0.0
    %292 = vmatpush.msra.mxu0 0.0
    %293 = vmatpush.msra.mxu0 0.0
    %294 = vmatpush.msra.mxu0 0.0
    %295 = vmatpush.msra.mxu0 %v160
    %296 = vmatmul.f32.gmra.mxu0 %v198
    %v297 = vpop.f32.mrf.mxu0
    %v298 = vadd.f32 0.0, %v297
    %299 = vdwg.mxu0
    %300 = vmatpush.msra.mxu0 0.0
    %301 = vmatpush.msra.mxu0 0.0
    %302 = vmatpush.msra.mxu0 0.0
    %303 = vmatpush.msra.mxu0 0.0
    %304 = vmatpush.msra.mxu0 0.0
    %305 = vmatpush.msra.mxu0 0.0
    %306 = vmatpush.msra.mxu0 0.0
    %307 = vmatpush.msra.mxu0 0.0
    %308 = vmatpush.msra.mxu0 0.0
    %309 = vmatpush.msra.mxu0 0.0
    %310 = vmatpush.msra.mxu0 0.0
    %311 = vmatpush.msra.mxu0 0.0
    %312 = vmatpush.msra.mxu0 0.0
    %313 = vmatpush.msra.mxu0 0.0
    %314 = vmatpush.msra.mxu0 0.0
    %315 = vmatpush.msra.mxu0 %v161
    %316 = vmatmul.f32.gmra.mxu0 %v198
    %v317 = vpop.f32.mrf.mxu0
    %v318 = vadd.f32 0.0, %v317
    %319 = vdwg.mxu0
    %320 = vmatpush.msra.mxu0 0.0
    %321 = vmatpush.msra.mxu0 0.0
    %322 = vmatpush.msra.mxu0 0.0
    %323 = vmatpush.msra.mxu0 0.0
    %324 = vmatpush.msra.mxu0 0.0
    %325 = vmatpush.msra.mxu0 0.0
    %326 = vmatpush.msra.mxu0 0.0
    %327 = vmatpush.msra.mxu0 0.0
    %328 = vmatpush.msra.mxu0 0.0
    %329 = vmatpush.msra.mxu0 0.0
    %330 = vmatpush.msra.mxu0 0.0
    %331 = vmatpush.msra.mxu0 0.0
    %332 = vmatpush.msra.mxu0 0.0
    %333 = vmatpush.msra.mxu0 0.0
    %334 = vmatpush.msra.mxu0 0.0
    %335 = vmatpush.msra.mxu0 %v162
    %336 = vmatmul.f32.gmra.mxu0 %v198
    %v337 = vpop.f32.mrf.mxu0
    %v338 = vadd.f32 0.0, %v337
    %339 = vdwg.mxu0
    %340 = vmatpush.msra.mxu0 0.0
    %341 = vmatpush.msra.mxu0 0.0
    %342 = vmatpush.msra.mxu0 0.0
    %343 = vmatpush.msra.mxu0 0.0
    %344 = vmatpush.msra.mxu0 0.0
    %345 = vmatpush.msra.mxu0 0.0
    %346 = vmatpush.msra.mxu0 0.0
    %347 = vmatpush.msra.mxu0 0.0
    %348 = vmatpush.msra.mxu0 0.0
    %349 = vmatpush.msra.mxu0 0.0
    %350 = vmatpush.msra.mxu0 0.0
    %351 = vmatpush.msra.mxu0 0.0
    %352 = vmatpush.msra.mxu0 0.0
    %353 = vmatpush.msra.mxu0 0.0
    %354 = vmatpush.msra.mxu0 0.0
    %355 = vmatpush.msra.mxu0 %v163
    %356 = vmatmul.f32.gmra.mxu0 %v198
    %v357 = vpop.f32.mrf.mxu0
    %v358 = vadd.f32 0.0, %v357
    %359 = vdwg.mxu0
    %v361 = vsel %vm196, %v27, 0
    %363 = vmatpush.msra.mxu0 0.0
    %364 = vmatpush.msra.mxu0 0.0
    %365 = vmatpush.msra.mxu0 0.0
    %366 = vmatpush.msra.mxu0 0.0
    %367 = vmatpush.msra.mxu0 0.0
    %368 = vmatpush.msra.mxu0 0.0
    %369 = vmatpush.msra.mxu0 0.0
    %370 = vmatpush.msra.mxu0 0.0
    %371 = vmatpush.msra.mxu0 0.0
    %372 = vmatpush.msra.mxu0 0.0
    %373 = vmatpush.msra.mxu0 0.0
    %374 = vmatpush.msra.mxu0 0.0
    %375 = vmatpush.msra.mxu0 0.0
    %376 = vmatpush.msra.mxu0 0.0
    %377 = vmatpush.msra.mxu0 0.0
    %378 = vmatpush.msra.mxu0 %v188
    %379 = vmatmul.f32.gmra.mxu0 %v361
    %v380 = vpop.f32.mrf.mxu0
    %v381 = vadd.f32 %v218, %v380
    %382 = vdwg.mxu0
    %383 = vmatpush.msra.mxu0 0.0
    %384 = vmatpush.msra.mxu0 0.0
    %385 = vmatpush.msra.mxu0 0.0
    %386 = vmatpush.msra.mxu0 0.0
    %387 = vmatpush.msra.mxu0 0.0
    %388 = vmatpush.msra.mxu0 0.0
    %389 = vmatpush.msra.mxu0 0.0
    %390 = vmatpush.msra.mxu0 0.0
    %391 = vmatpush.msra.mxu0 0.0
    %392 = vmatpush.msra.mxu0 0.0
    %393 = vmatpush.msra.mxu0 0.0
    %394 = vmatpush.msra.mxu0 0.0
    %395 = vmatpush.msra.mxu0 0.0
    %396 = vmatpush.msra.mxu0 0.0
    %397 = vmatpush.msra.mxu0 0.0
    %398 = vmatpush.msra.mxu0 %v189
    %399 = vmatmul.f32.gmra.mxu0 %v361
    %v400 = vpop.f32.mrf.mxu0
    %v401 = vadd.f32 %v238, %v400
    %402 = vdwg.mxu0
    %403 = vmatpush.msra.mxu0 0.0
    %404 = vmatpush.msra.mxu0 0.0
    %405 = vmatpush.msra.mxu0 0.0
    %406 = vmatpush.msra.mxu0 0.0
    %407 = vmatpush.msra.mxu0 0.0
    %408 = vmatpush.msra.mxu0 0.0
    %409 = vmatpush.msra.mxu0 0.0
    %410 = vmatpush.msra.mxu0 0.0
    %411 = vmatpush.msra.mxu0 0.0
    %412 = vmatpush.msra.mxu0 0.0
    %413 = vmatpush.msra.mxu0 0.0
    %414 = vmatpush.msra.mxu0 0.0
    %415 = vmatpush.msra.mxu0 0.0
    %416 = vmatpush.msra.mxu0 0.0
    %417 = vmatpush.msra.mxu0 0.0
    %418 = vmatpush.msra.mxu0 %v190
    %419 = vmatmul.f32.gmra.mxu0 %v361
    %v420 = vpop.f32.mrf.mxu0
    %v421 = vadd.f32 %v258, %v420
    %422 = vdwg.mxu0
    %423 = vmatpush.msra.mxu0 0.0
    %424 = vmatpush.msra.mxu0 0.0
    %425 = vmatpush.msra.mxu0 0.0
    %426 = vmatpush.msra.mxu0 0.0
    %427 = vmatpush.msra.mxu0 0.0
    %428 = vmatpush.msra.mxu0 0.0
    %429 = vmatpush.msra.mxu0 0.0
    %430 = vmatpush.msra.mxu0 0.0
    %431 = vmatpush.msra.mxu0 0.0
    %432 = vmatpush.msra.mxu0 0.0
    %433 = vmatpush.msra.mxu0 0.0
    %434 = vmatpush.msra.mxu0 0.0
    %435 = vmatpush.msra.mxu0 0.0
    %436 = vmatpush.msra.mxu0 0.0
    %437 = vmatpush.msra.mxu0 0.0
    %438 = vmatpush.msra.mxu0 %v191
    %439 = vmatmul.f32.gmra.mxu0 %v361
    %v440 = vpop.f32.mrf.mxu0
    %v441 = vadd.f32 %v278, %v440
    %442 = vdwg.mxu0
    %443 = vmatpush.msra.mxu0 0.0
    %444 = vmatpush.msra.mxu0 0.0
    %445 = vmatpush.msra.mxu0 0.0
    %446 = vmatpush.msra.mxu0 0.0
    %447 = vmatpush.msra.mxu0 0.0
    %448 = vmatpush.msra.mxu0 0.0
    %449 = vmatpush.msra.mxu0 0.0
    %450 = vmatpush.msra.mxu0 0.0
    %451 = vmatpush.msra.mxu0 0.0
    %452 = vmatpush.msra.mxu0 0.0
    %453 = vmatpush.msra.mxu0 0.0
    %454 = vmatpush.msra.mxu0 0.0
    %455 = vmatpush.msra.mxu0 0.0
    %456 = vmatpush.msra.mxu0 0.0
    %457 = vmatpush.msra.mxu0 0.0
    %458 = vmatpush.msra.mxu0 %v192
    %459 = vmatmul.f32.gmra.mxu0 %v361
    %v460 = vpop.f32.mrf.mxu0
    %v461 = vadd.f32 %v298, %v460
    %462 = vdwg.mxu0
    %463 = vmatpush.msra.mxu0 0.0
    %464 = vmatpush.msra.mxu0 0.0
    %465 = vmatpush.msra.mxu0 0.0
    %466 = vmatpush.msra.mxu0 0.0
    %467 = vmatpush.msra.mxu0 0.0
    %468 = vmatpush.msra.mxu0 0.0
    %469 = vmatpush.msra.mxu0 0.0
    %470 = vmatpush.msra.mxu0 0.0
    %471 = vmatpush.msra.mxu0 0.0
    %472 = vmatpush.msra.mxu0 0.0
    %473 = vmatpush.msra.mxu0 0.0
    %474 = vmatpush.msra.mxu0 0.0
    %475 = vmatpush.msra.mxu0 0.0
    %476 = vmatpush.msra.mxu0 0.0
    %477 = vmatpush.msra.mxu0 0.0
    %478 = vmatpush.msra.mxu0 %v193
    %479 = vmatmul.f32.gmra.mxu0 %v361
    %v480 = vpop.f32.mrf.mxu0
    %v481 = vadd.f32 %v318, %v480
    %482 = vdwg.mxu0
    %483 = vmatpush.msra.mxu0 0.0
    %484 = vmatpush.msra.mxu0 0.0
    %485 = vmatpush.msra.mxu0 0.0
    %486 = vmatpush.msra.mxu0 0.0
    %487 = vmatpush.msra.mxu0 0.0
    %488 = vmatpush.msra.mxu0 0.0
    %489 = vmatpush.msra.mxu0 0.0
    %490 = vmatpush.msra.mxu0 0.0
    %491 = vmatpush.msra.mxu0 0.0
    %492 = vmatpush.msra.mxu0 0.0
    %493 = vmatpush.msra.mxu0 0.0
    %494 = vmatpush.msra.mxu0 0.0
    %495 = vmatpush.msra.mxu0 0.0
    %496 = vmatpush.msra.mxu0 0.0
    %497 = vmatpush.msra.mxu0 0.0
    %498 = vmatpush.msra.mxu0 %v194
    %499 = vmatmul.f32.gmra.mxu0 %v361
    %v500 = vpop.f32.mrf.mxu0
    %v501 = vadd.f32 %v338, %v500
    %502 = vdwg.mxu0
    %503 = vmatpush.msra.mxu0 0.0
    %504 = vmatpush.msra.mxu0 0.0
    %505 = vmatpush.msra.mxu0 0.0
    %506 = vmatpush.msra.mxu0 0.0
    %507 = vmatpush.msra.mxu0 0.0
    %508 = vmatpush.msra.mxu0 0.0
    %509 = vmatpush.msra.mxu0 0.0
    %510 = vmatpush.msra.mxu0 0.0
    %511 = vmatpush.msra.mxu0 0.0
    %512 = vmatpush.msra.mxu0 0.0
    %513 = vmatpush.msra.mxu0 0.0
    %514 = vmatpush.msra.mxu0 0.0
    %515 = vmatpush.msra.mxu0 0.0
    %516 = vmatpush.msra.mxu0 0.0
    %517 = vmatpush.msra.mxu0 0.0
    %518 = vmatpush.msra.mxu0 %v195
    %519 = vmatmul.f32.gmra.mxu0 %v361
    %v520 = vpop.f32.mrf.mxu0
    %v521 = vadd.f32 %v358, %v520
    %522 = vdwg.mxu0
    %523 = vset.pattern.permute.xlu0 4
    %524 = vperm.xlu0 %523, %v25
    %v525 = vpop.permute.xlu0 %524
    %v527 = vadd.f32 %v381, %v525
    %v528 = vadd.f32 %v401, %v525
    %v529 = vadd.f32 %v421, %v525
    %v530 = vadd.f32 %v441, %v525
    %v531 = vadd.f32 %v461, %v525
    %v532 = vadd.f32 %v481, %v525
    %v533 = vadd.f32 %v501, %v525
    %v534 = vadd.f32 %v521, %v525
    %v535 = vmax.f32 %v527, 0.0
    %v536 = vmax.f32 %v528, 0.0
    %v537 = vmax.f32 %v529, 0.0
    %v538 = vmax.f32 %v530, 0.0
    %v539 = vmax.f32 %v531, 0.0
    %v540 = vmax.f32 %v532, 0.0
    %v541 = vmax.f32 %v533, 0.0
    %v542 = vmax.f32 %v534, 0.0
    %543 = vset.pattern.permute.xlu0 2
    %544 = vperm.xlu0 %543, %v25
    %v545 = vpop.permute.xlu0 %544
    %v547 = vmul.f32 %v545, %v35
    %v548 = vmul.f32 %v545, %v36
    %v549 = vmul.f32 %v545, %v37
    %v550 = vmul.f32 %v545, %v38
    %v551 = vmul.f32 %v545, %v39
    %v552 = vmul.f32 %v545, %v40
    %v553 = vmul.f32 %v545, %v41
    %v554 = vmul.f32 %v545, %v42
    %v555 = vadd.f32 %v535, %v547
    %v556 = vadd.f32 %v536, %v548
    %v557 = vadd.f32 %v537, %v549
    %v558 = vadd.f32 %v538, %v550
    %v559 = vadd.f32 %v539, %v551
    %v560 = vadd.f32 %v540, %v552
    %v561 = vadd.f32 %v541, %v553
    %v562 = vadd.f32 %v542, %v554
    %563 = vset.pattern.permute.xlu0 5
    %564 = vperm.xlu0 %563, %v25
    %v565 = vpop.permute.xlu0 %564
    %v567 = vadd.f32 %v555, %v565
    %v568 = vadd.f32 %v556, %v565
    %v569 = vadd.f32 %v557, %v565
    %v570 = vadd.f32 %v558, %v565
    %v571 = vadd.f32 %v559, %v565
    %v572 = vadd.f32 %v560, %v565
    %v573 = vadd.f32 %v561, %v565
    %v574 = vadd.f32 %v562, %v565
    %v575 = vmax.f32 %v567, 0.0
    %v576 = vmax.f32 %v568, 0.0
    %v577 = vmax.f32 %v569, 0.0
    %v578 = vmax.f32 %v570, 0.0
    %v579 = vmax.f32 %v571, 0.0
    %v580 = vmax.f32 %v572, 0.0
    %v581 = vmax.f32 %v573, 0.0
    %v582 = vmax.f32 %v574, 0.0
    %583 = vrot.lane.b32.xlu0 %v575, 2
    %v584 = vpop.permute.xlu0 %583
    %585 = vrot.lane.b32.xlu0 %v576, 2
    %v586 = vpop.permute.xlu0 %585
    %587 = vrot.lane.b32.xlu0 %v577, 2
    %v588 = vpop.permute.xlu0 %587
    %589 = vrot.lane.b32.xlu0 %v578, 2
    %v590 = vpop.permute.xlu0 %589
    %591 = vrot.lane.b32.xlu0 %v579, 2
    %v592 = vpop.permute.xlu0 %591
    %593 = vrot.lane.b32.xlu0 %v580, 2
    %v594 = vpop.permute.xlu0 %593
    %595 = vrot.lane.b32.xlu0 %v581, 2
    %v596 = vpop.permute.xlu0 %595
    %597 = vrot.lane.b32.xlu0 %v582, 2
    %v598 = vpop.permute.xlu0 %597
    %vm599 = vcmp.lt.s32.totalorder %v68, 2
    %v600 = vsel %vm599, %v596, %v598
    %v601 = vsel %vm599, %v594, %v596
    %v602 = vsel %vm599, %v592, %v594
    %v603 = vsel %vm599, %v590, %v592
    %v604 = vsel %vm599, %v588, %v590
    %v605 = vsel %vm599, %v586, %v588
    %v606 = vsel %vm599, %v584, %v586
    %v607 = vsel %vm599, %v598, %v584
    %v609 = vperm.slane %v24, 0
    %v610 = vperm.slane %v24, 1
    %v611 = vperm.slane %v24, 2
    %v612 = vperm.slane %v24, 3
    %v613 = vperm.slane %v24, 4
    %v614 = vperm.slane %v24, 5
    %v615 = vperm.slane %v24, 6
    %v616 = vperm.slane %v24, 7
    %v625 = vmul.f32 %v607, %v609
    %v626 = vmul.f32 %v606, %v610
    %v627 = vmul.f32 %v605, %v611
    %v628 = vmul.f32 %v604, %v612
    %v629 = vmul.f32 %v603, %v613
    %v630 = vmul.f32 %v602, %v614
    %v631 = vmul.f32 %v601, %v615
    %v632 = vmul.f32 %v600, %v616
    %v634 = vsel %vm196, %v30, 0
    %636 = vmatpush.msra.mxu0 0.0
    %637 = vmatpush.msra.mxu0 0.0
    %638 = vmatpush.msra.mxu0 0.0
    %639 = vmatpush.msra.mxu0 0.0
    %640 = vmatpush.msra.mxu0 0.0
    %641 = vmatpush.msra.mxu0 0.0
    %642 = vmatpush.msra.mxu0 0.0
    %643 = vmatpush.msra.mxu0 0.0
    %644 = vmatpush.msra.mxu0 0.0
    %645 = vmatpush.msra.mxu0 0.0
    %646 = vmatpush.msra.mxu0 0.0
    %647 = vmatpush.msra.mxu0 0.0
    %648 = vmatpush.msra.mxu0 0.0
    %649 = vmatpush.msra.mxu0 0.0
    %650 = vmatpush.msra.mxu0 0.0
    %651 = vmatpush.msra.mxu0 %v575
    %652 = vmatmul.f32.gmra.mxu0 %v634
    %v653 = vpop.f32.mrf.mxu0
    %v654 = vadd.f32 0.0, %v653
    %655 = vdwg.mxu0
    %656 = vmatpush.msra.mxu0 0.0
    %657 = vmatpush.msra.mxu0 0.0
    %658 = vmatpush.msra.mxu0 0.0
    %659 = vmatpush.msra.mxu0 0.0
    %660 = vmatpush.msra.mxu0 0.0
    %661 = vmatpush.msra.mxu0 0.0
    %662 = vmatpush.msra.mxu0 0.0
    %663 = vmatpush.msra.mxu0 0.0
    %664 = vmatpush.msra.mxu0 0.0
    %665 = vmatpush.msra.mxu0 0.0
    %666 = vmatpush.msra.mxu0 0.0
    %667 = vmatpush.msra.mxu0 0.0
    %668 = vmatpush.msra.mxu0 0.0
    %669 = vmatpush.msra.mxu0 0.0
    %670 = vmatpush.msra.mxu0 0.0
    %671 = vmatpush.msra.mxu0 %v576
    %672 = vmatmul.f32.gmra.mxu0 %v634
    %v673 = vpop.f32.mrf.mxu0
    %v674 = vadd.f32 0.0, %v673
    %675 = vdwg.mxu0
    %676 = vmatpush.msra.mxu0 0.0
    %677 = vmatpush.msra.mxu0 0.0
    %678 = vmatpush.msra.mxu0 0.0
    %679 = vmatpush.msra.mxu0 0.0
    %680 = vmatpush.msra.mxu0 0.0
    %681 = vmatpush.msra.mxu0 0.0
    %682 = vmatpush.msra.mxu0 0.0
    %683 = vmatpush.msra.mxu0 0.0
    %684 = vmatpush.msra.mxu0 0.0
    %685 = vmatpush.msra.mxu0 0.0
    %686 = vmatpush.msra.mxu0 0.0
    %687 = vmatpush.msra.mxu0 0.0
    %688 = vmatpush.msra.mxu0 0.0
    %689 = vmatpush.msra.mxu0 0.0
    %690 = vmatpush.msra.mxu0 0.0
    %691 = vmatpush.msra.mxu0 %v577
    %692 = vmatmul.f32.gmra.mxu0 %v634
    %v693 = vpop.f32.mrf.mxu0
    %v694 = vadd.f32 0.0, %v693
    %695 = vdwg.mxu0
    %696 = vmatpush.msra.mxu0 0.0
    %697 = vmatpush.msra.mxu0 0.0
    %698 = vmatpush.msra.mxu0 0.0
    %699 = vmatpush.msra.mxu0 0.0
    %700 = vmatpush.msra.mxu0 0.0
    %701 = vmatpush.msra.mxu0 0.0
    %702 = vmatpush.msra.mxu0 0.0
    %703 = vmatpush.msra.mxu0 0.0
    %704 = vmatpush.msra.mxu0 0.0
    %705 = vmatpush.msra.mxu0 0.0
    %706 = vmatpush.msra.mxu0 0.0
    %707 = vmatpush.msra.mxu0 0.0
    %708 = vmatpush.msra.mxu0 0.0
    %709 = vmatpush.msra.mxu0 0.0
    %710 = vmatpush.msra.mxu0 0.0
    %711 = vmatpush.msra.mxu0 %v578
    %712 = vmatmul.f32.gmra.mxu0 %v634
    %v713 = vpop.f32.mrf.mxu0
    %v714 = vadd.f32 0.0, %v713
    %715 = vdwg.mxu0
    %716 = vmatpush.msra.mxu0 0.0
    %717 = vmatpush.msra.mxu0 0.0
    %718 = vmatpush.msra.mxu0 0.0
    %719 = vmatpush.msra.mxu0 0.0
    %720 = vmatpush.msra.mxu0 0.0
    %721 = vmatpush.msra.mxu0 0.0
    %722 = vmatpush.msra.mxu0 0.0
    %723 = vmatpush.msra.mxu0 0.0
    %724 = vmatpush.msra.mxu0 0.0
    %725 = vmatpush.msra.mxu0 0.0
    %726 = vmatpush.msra.mxu0 0.0
    %727 = vmatpush.msra.mxu0 0.0
    %728 = vmatpush.msra.mxu0 0.0
    %729 = vmatpush.msra.mxu0 0.0
    %730 = vmatpush.msra.mxu0 0.0
    %731 = vmatpush.msra.mxu0 %v579
    %732 = vmatmul.f32.gmra.mxu0 %v634
    %v733 = vpop.f32.mrf.mxu0
    %v734 = vadd.f32 0.0, %v733
    %735 = vdwg.mxu0
    %736 = vmatpush.msra.mxu0 0.0
    %737 = vmatpush.msra.mxu0 0.0
    %738 = vmatpush.msra.mxu0 0.0
    %739 = vmatpush.msra.mxu0 0.0
    %740 = vmatpush.msra.mxu0 0.0
    %741 = vmatpush.msra.mxu0 0.0
    %742 = vmatpush.msra.mxu0 0.0
    %743 = vmatpush.msra.mxu0 0.0
    %744 = vmatpush.msra.mxu0 0.0
    %745 = vmatpush.msra.mxu0 0.0
    %746 = vmatpush.msra.mxu0 0.0
    %747 = vmatpush.msra.mxu0 0.0
    %748 = vmatpush.msra.mxu0 0.0
    %749 = vmatpush.msra.mxu0 0.0
    %750 = vmatpush.msra.mxu0 0.0
    %751 = vmatpush.msra.mxu0 %v580
    %752 = vmatmul.f32.gmra.mxu0 %v634
    %v753 = vpop.f32.mrf.mxu0
    %v754 = vadd.f32 0.0, %v753
    %755 = vdwg.mxu0
    %756 = vmatpush.msra.mxu0 0.0
    %757 = vmatpush.msra.mxu0 0.0
    %758 = vmatpush.msra.mxu0 0.0
    %759 = vmatpush.msra.mxu0 0.0
    %760 = vmatpush.msra.mxu0 0.0
    %761 = vmatpush.msra.mxu0 0.0
    %762 = vmatpush.msra.mxu0 0.0
    %763 = vmatpush.msra.mxu0 0.0
    %764 = vmatpush.msra.mxu0 0.0
    %765 = vmatpush.msra.mxu0 0.0
    %766 = vmatpush.msra.mxu0 0.0
    %767 = vmatpush.msra.mxu0 0.0
    %768 = vmatpush.msra.mxu0 0.0
    %769 = vmatpush.msra.mxu0 0.0
    %770 = vmatpush.msra.mxu0 0.0
    %771 = vmatpush.msra.mxu0 %v581
    %772 = vmatmul.f32.gmra.mxu0 %v634
    %v773 = vpop.f32.mrf.mxu0
    %v774 = vadd.f32 0.0, %v773
    %775 = vdwg.mxu0
    %776 = vmatpush.msra.mxu0 0.0
    %777 = vmatpush.msra.mxu0 0.0
    %778 = vmatpush.msra.mxu0 0.0
    %779 = vmatpush.msra.mxu0 0.0
    %780 = vmatpush.msra.mxu0 0.0
    %781 = vmatpush.msra.mxu0 0.0
    %782 = vmatpush.msra.mxu0 0.0
    %783 = vmatpush.msra.mxu0 0.0
    %784 = vmatpush.msra.mxu0 0.0
    %785 = vmatpush.msra.mxu0 0.0
    %786 = vmatpush.msra.mxu0 0.0
    %787 = vmatpush.msra.mxu0 0.0
    %788 = vmatpush.msra.mxu0 0.0
    %789 = vmatpush.msra.mxu0 0.0
    %790 = vmatpush.msra.mxu0 0.0
    %791 = vmatpush.msra.mxu0 %v582
    %792 = vmatmul.f32.gmra.mxu0 %v634
    %v793 = vpop.f32.mrf.mxu0
    %v794 = vadd.f32 0.0, %v793
    %795 = vdwg.mxu0
    %v797 = vsel %vm196, %v29, 0
    %799 = vmatpush.msra.mxu0 0.0
    %800 = vmatpush.msra.mxu0 0.0
    %801 = vmatpush.msra.mxu0 0.0
    %802 = vmatpush.msra.mxu0 0.0
    %803 = vmatpush.msra.mxu0 0.0
    %804 = vmatpush.msra.mxu0 0.0
    %805 = vmatpush.msra.mxu0 0.0
    %806 = vmatpush.msra.mxu0 0.0
    %807 = vmatpush.msra.mxu0 0.0
    %808 = vmatpush.msra.mxu0 0.0
    %809 = vmatpush.msra.mxu0 0.0
    %810 = vmatpush.msra.mxu0 0.0
    %811 = vmatpush.msra.mxu0 0.0
    %812 = vmatpush.msra.mxu0 0.0
    %813 = vmatpush.msra.mxu0 0.0
    %814 = vmatpush.msra.mxu0 %v625
    %815 = vmatmul.f32.gmra.mxu0 %v797
    %v816 = vpop.f32.mrf.mxu0
    %v817 = vadd.f32 %v654, %v816
    %818 = vdwg.mxu0
    %819 = vmatpush.msra.mxu0 0.0
    %820 = vmatpush.msra.mxu0 0.0
    %821 = vmatpush.msra.mxu0 0.0
    %822 = vmatpush.msra.mxu0 0.0
    %823 = vmatpush.msra.mxu0 0.0
    %824 = vmatpush.msra.mxu0 0.0
    %825 = vmatpush.msra.mxu0 0.0
    %826 = vmatpush.msra.mxu0 0.0
    %827 = vmatpush.msra.mxu0 0.0
    %828 = vmatpush.msra.mxu0 0.0
    %829 = vmatpush.msra.mxu0 0.0
    %830 = vmatpush.msra.mxu0 0.0
    %831 = vmatpush.msra.mxu0 0.0
    %832 = vmatpush.msra.mxu0 0.0
    %833 = vmatpush.msra.mxu0 0.0
    %834 = vmatpush.msra.mxu0 %v626
    %835 = vmatmul.f32.gmra.mxu0 %v797
    %v836 = vpop.f32.mrf.mxu0
    %v837 = vadd.f32 %v674, %v836
    %838 = vdwg.mxu0
    %839 = vmatpush.msra.mxu0 0.0
    %840 = vmatpush.msra.mxu0 0.0
    %841 = vmatpush.msra.mxu0 0.0
    %842 = vmatpush.msra.mxu0 0.0
    %843 = vmatpush.msra.mxu0 0.0
    %844 = vmatpush.msra.mxu0 0.0
    %845 = vmatpush.msra.mxu0 0.0
    %846 = vmatpush.msra.mxu0 0.0
    %847 = vmatpush.msra.mxu0 0.0
    %848 = vmatpush.msra.mxu0 0.0
    %849 = vmatpush.msra.mxu0 0.0
    %850 = vmatpush.msra.mxu0 0.0
    %851 = vmatpush.msra.mxu0 0.0
    %852 = vmatpush.msra.mxu0 0.0
    %853 = vmatpush.msra.mxu0 0.0
    %854 = vmatpush.msra.mxu0 %v627
    %855 = vmatmul.f32.gmra.mxu0 %v797
    %v856 = vpop.f32.mrf.mxu0
    %v857 = vadd.f32 %v694, %v856
    %858 = vdwg.mxu0
    %859 = vmatpush.msra.mxu0 0.0
    %860 = vmatpush.msra.mxu0 0.0
    %861 = vmatpush.msra.mxu0 0.0
    %862 = vmatpush.msra.mxu0 0.0
    %863 = vmatpush.msra.mxu0 0.0
    %864 = vmatpush.msra.mxu0 0.0
    %865 = vmatpush.msra.mxu0 0.0
    %866 = vmatpush.msra.mxu0 0.0
    %867 = vmatpush.msra.mxu0 0.0
    %868 = vmatpush.msra.mxu0 0.0
    %869 = vmatpush.msra.mxu0 0.0
    %870 = vmatpush.msra.mxu0 0.0
    %871 = vmatpush.msra.mxu0 0.0
    %872 = vmatpush.msra.mxu0 0.0
    %873 = vmatpush.msra.mxu0 0.0
    %874 = vmatpush.msra.mxu0 %v628
    %875 = vmatmul.f32.gmra.mxu0 %v797
    %v876 = vpop.f32.mrf.mxu0
    %v877 = vadd.f32 %v714, %v876
    %878 = vdwg.mxu0
    %879 = vmatpush.msra.mxu0 0.0
    %880 = vmatpush.msra.mxu0 0.0
    %881 = vmatpush.msra.mxu0 0.0
    %882 = vmatpush.msra.mxu0 0.0
    %883 = vmatpush.msra.mxu0 0.0
    %884 = vmatpush.msra.mxu0 0.0
    %885 = vmatpush.msra.mxu0 0.0
    %886 = vmatpush.msra.mxu0 0.0
    %887 = vmatpush.msra.mxu0 0.0
    %888 = vmatpush.msra.mxu0 0.0
    %889 = vmatpush.msra.mxu0 0.0
    %890 = vmatpush.msra.mxu0 0.0
    %891 = vmatpush.msra.mxu0 0.0
    %892 = vmatpush.msra.mxu0 0.0
    %893 = vmatpush.msra.mxu0 0.0
    %894 = vmatpush.msra.mxu0 %v629
    %895 = vmatmul.f32.gmra.mxu0 %v797
    %v896 = vpop.f32.mrf.mxu0
    %v897 = vadd.f32 %v734, %v896
    %898 = vdwg.mxu0
    %899 = vmatpush.msra.mxu0 0.0
    %900 = vmatpush.msra.mxu0 0.0
    %901 = vmatpush.msra.mxu0 0.0
    %902 = vmatpush.msra.mxu0 0.0
    %903 = vmatpush.msra.mxu0 0.0
    %904 = vmatpush.msra.mxu0 0.0
    %905 = vmatpush.msra.mxu0 0.0
    %906 = vmatpush.msra.mxu0 0.0
    %907 = vmatpush.msra.mxu0 0.0
    %908 = vmatpush.msra.mxu0 0.0
    %909 = vmatpush.msra.mxu0 0.0
    %910 = vmatpush.msra.mxu0 0.0
    %911 = vmatpush.msra.mxu0 0.0
    %912 = vmatpush.msra.mxu0 0.0
    %913 = vmatpush.msra.mxu0 0.0
    %914 = vmatpush.msra.mxu0 %v630
    %915 = vmatmul.f32.gmra.mxu0 %v797
    %v916 = vpop.f32.mrf.mxu0
    %v917 = vadd.f32 %v754, %v916
    %918 = vdwg.mxu0
    %919 = vmatpush.msra.mxu0 0.0
    %920 = vmatpush.msra.mxu0 0.0
    %921 = vmatpush.msra.mxu0 0.0
    %922 = vmatpush.msra.mxu0 0.0
    %923 = vmatpush.msra.mxu0 0.0
    %924 = vmatpush.msra.mxu0 0.0
    %925 = vmatpush.msra.mxu0 0.0
    %926 = vmatpush.msra.mxu0 0.0
    %927 = vmatpush.msra.mxu0 0.0
    %928 = vmatpush.msra.mxu0 0.0
    %929 = vmatpush.msra.mxu0 0.0
    %930 = vmatpush.msra.mxu0 0.0
    %931 = vmatpush.msra.mxu0 0.0
    %932 = vmatpush.msra.mxu0 0.0
    %933 = vmatpush.msra.mxu0 0.0
    %934 = vmatpush.msra.mxu0 %v631
    %935 = vmatmul.f32.gmra.mxu0 %v797
    %v936 = vpop.f32.mrf.mxu0
    %v937 = vadd.f32 %v774, %v936
    %938 = vdwg.mxu0
    %939 = vmatpush.msra.mxu0 0.0
    %940 = vmatpush.msra.mxu0 0.0
    %941 = vmatpush.msra.mxu0 0.0
    %942 = vmatpush.msra.mxu0 0.0
    %943 = vmatpush.msra.mxu0 0.0
    %944 = vmatpush.msra.mxu0 0.0
    %945 = vmatpush.msra.mxu0 0.0
    %946 = vmatpush.msra.mxu0 0.0
    %947 = vmatpush.msra.mxu0 0.0
    %948 = vmatpush.msra.mxu0 0.0
    %949 = vmatpush.msra.mxu0 0.0
    %950 = vmatpush.msra.mxu0 0.0
    %951 = vmatpush.msra.mxu0 0.0
    %952 = vmatpush.msra.mxu0 0.0
    %953 = vmatpush.msra.mxu0 0.0
    %954 = vmatpush.msra.mxu0 %v632
    %955 = vmatmul.f32.gmra.mxu0 %v797
    %v956 = vpop.f32.mrf.mxu0
    %v957 = vadd.f32 %v794, %v956
    %958 = vdwg.mxu0
    %959 = vset.pattern.permute.xlu0 6
    %960 = vperm.xlu0 %959, %v25
    %v961 = vpop.permute.xlu0 %960
    %v963 = vadd.f32 %v817, %v961
    %v964 = vadd.f32 %v837, %v961
    %v965 = vadd.f32 %v857, %v961
    %v966 = vadd.f32 %v877, %v961
    %v967 = vadd.f32 %v897, %v961
    %v968 = vadd.f32 %v917, %v961
    %v969 = vadd.f32 %v937, %v961
    %v970 = vadd.f32 %v957, %v961
    %v971 = vmax.f32 %v963, 0.0
    %v972 = vmax.f32 %v964, 0.0
    %v973 = vmax.f32 %v965, 0.0
    %v974 = vmax.f32 %v966, 0.0
    %v975 = vmax.f32 %v967, 0.0
    %v976 = vmax.f32 %v968, 0.0
    %v977 = vmax.f32 %v969, 0.0
    %v978 = vmax.f32 %v970, 0.0
    %979 = vrot.lane.b32.xlu0 %v971, 2
    %v980 = vpop.permute.xlu0 %979
    %981 = vrot.lane.b32.xlu0 %v972, 2
    %v982 = vpop.permute.xlu0 %981
    %983 = vrot.lane.b32.xlu0 %v973, 2
    %v984 = vpop.permute.xlu0 %983
    %985 = vrot.lane.b32.xlu0 %v974, 2
    %v986 = vpop.permute.xlu0 %985
    %987 = vrot.lane.b32.xlu0 %v975, 2
    %v988 = vpop.permute.xlu0 %987
    %989 = vrot.lane.b32.xlu0 %v976, 2
    %v990 = vpop.permute.xlu0 %989
    %991 = vrot.lane.b32.xlu0 %v977, 2
    %v992 = vpop.permute.xlu0 %991
    %993 = vrot.lane.b32.xlu0 %v978, 2
    %v994 = vpop.permute.xlu0 %993
    %v995 = vsel %vm599, %v992, %v994
    %v996 = vsel %vm599, %v990, %v992
    %v997 = vsel %vm599, %v988, %v990
    %v998 = vsel %vm599, %v986, %v988
    %v999 = vsel %vm599, %v984, %v986
    %v1000 = vsel %vm599, %v982, %v984
    %v1001 = vsel %vm599, %v980, %v982
    %v1002 = vsel %vm599, %v994, %v980
    %v1003 = vmul.f32 %v1002, %v609
    %v1004 = vmul.f32 %v1001, %v610
    %v1005 = vmul.f32 %v1000, %v611
    %v1006 = vmul.f32 %v999, %v612
    %v1007 = vmul.f32 %v998, %v613
    %v1008 = vmul.f32 %v997, %v614
    %v1009 = vmul.f32 %v996, %v615
    %v1010 = vmul.f32 %v995, %v616
    %v1012 = vsel %vm196, %v32, 0
    %1014 = vmatpush.msra.mxu0 0.0
    %1015 = vmatpush.msra.mxu0 0.0
    %1016 = vmatpush.msra.mxu0 0.0
    %1017 = vmatpush.msra.mxu0 0.0
    %1018 = vmatpush.msra.mxu0 0.0
    %1019 = vmatpush.msra.mxu0 0.0
    %1020 = vmatpush.msra.mxu0 0.0
    %1021 = vmatpush.msra.mxu0 0.0
    %1022 = vmatpush.msra.mxu0 0.0
    %1023 = vmatpush.msra.mxu0 0.0
    %1024 = vmatpush.msra.mxu0 0.0
    %1025 = vmatpush.msra.mxu0 0.0
    %1026 = vmatpush.msra.mxu0 0.0
    %1027 = vmatpush.msra.mxu0 0.0
    %1028 = vmatpush.msra.mxu0 0.0
    %1029 = vmatpush.msra.mxu0 %v971
    %1030 = vmatmul.f32.gmra.mxu0 %v1012
    %v1031 = vpop.f32.mrf.mxu0
    %v1032 = vadd.f32 0.0, %v1031
    %1033 = vdwg.mxu0
    %1034 = vmatpush.msra.mxu0 0.0
    %1035 = vmatpush.msra.mxu0 0.0
    %1036 = vmatpush.msra.mxu0 0.0
    %1037 = vmatpush.msra.mxu0 0.0
    %1038 = vmatpush.msra.mxu0 0.0
    %1039 = vmatpush.msra.mxu0 0.0
    %1040 = vmatpush.msra.mxu0 0.0
    %1041 = vmatpush.msra.mxu0 0.0
    %1042 = vmatpush.msra.mxu0 0.0
    %1043 = vmatpush.msra.mxu0 0.0
    %1044 = vmatpush.msra.mxu0 0.0
    %1045 = vmatpush.msra.mxu0 0.0
    %1046 = vmatpush.msra.mxu0 0.0
    %1047 = vmatpush.msra.mxu0 0.0
    %1048 = vmatpush.msra.mxu0 0.0
    %1049 = vmatpush.msra.mxu0 %v972
    %1050 = vmatmul.f32.gmra.mxu0 %v1012
    %v1051 = vpop.f32.mrf.mxu0
    %v1052 = vadd.f32 0.0, %v1051
    %1053 = vdwg.mxu0
    %1054 = vmatpush.msra.mxu0 0.0
    %1055 = vmatpush.msra.mxu0 0.0
    %1056 = vmatpush.msra.mxu0 0.0
    %1057 = vmatpush.msra.mxu0 0.0
    %1058 = vmatpush.msra.mxu0 0.0
    %1059 = vmatpush.msra.mxu0 0.0
    %1060 = vmatpush.msra.mxu0 0.0
    %1061 = vmatpush.msra.mxu0 0.0
    %1062 = vmatpush.msra.mxu0 0.0
    %1063 = vmatpush.msra.mxu0 0.0
    %1064 = vmatpush.msra.mxu0 0.0
    %1065 = vmatpush.msra.mxu0 0.0
    %1066 = vmatpush.msra.mxu0 0.0
    %1067 = vmatpush.msra.mxu0 0.0
    %1068 = vmatpush.msra.mxu0 0.0
    %1069 = vmatpush.msra.mxu0 %v973
    %1070 = vmatmul.f32.gmra.mxu0 %v1012
    %v1071 = vpop.f32.mrf.mxu0
    %v1072 = vadd.f32 0.0, %v1071
    %1073 = vdwg.mxu0
    %1074 = vmatpush.msra.mxu0 0.0
    %1075 = vmatpush.msra.mxu0 0.0
    %1076 = vmatpush.msra.mxu0 0.0
    %1077 = vmatpush.msra.mxu0 0.0
    %1078 = vmatpush.msra.mxu0 0.0
    %1079 = vmatpush.msra.mxu0 0.0
    %1080 = vmatpush.msra.mxu0 0.0
    %1081 = vmatpush.msra.mxu0 0.0
    %1082 = vmatpush.msra.mxu0 0.0
    %1083 = vmatpush.msra.mxu0 0.0
    %1084 = vmatpush.msra.mxu0 0.0
    %1085 = vmatpush.msra.mxu0 0.0
    %1086 = vmatpush.msra.mxu0 0.0
    %1087 = vmatpush.msra.mxu0 0.0
    %1088 = vmatpush.msra.mxu0 0.0
    %1089 = vmatpush.msra.mxu0 %v974
    %1090 = vmatmul.f32.gmra.mxu0 %v1012
    %v1091 = vpop.f32.mrf.mxu0
    %v1092 = vadd.f32 0.0, %v1091
    %1093 = vdwg.mxu0
    %1094 = vmatpush.msra.mxu0 0.0
    %1095 = vmatpush.msra.mxu0 0.0
    %1096 = vmatpush.msra.mxu0 0.0
    %1097 = vmatpush.msra.mxu0 0.0
    %1098 = vmatpush.msra.mxu0 0.0
    %1099 = vmatpush.msra.mxu0 0.0
    %1100 = vmatpush.msra.mxu0 0.0
    %1101 = vmatpush.msra.mxu0 0.0
    %1102 = vmatpush.msra.mxu0 0.0
    %1103 = vmatpush.msra.mxu0 0.0
    %1104 = vmatpush.msra.mxu0 0.0
    %1105 = vmatpush.msra.mxu0 0.0
    %1106 = vmatpush.msra.mxu0 0.0
    %1107 = vmatpush.msra.mxu0 0.0
    %1108 = vmatpush.msra.mxu0 0.0
    %1109 = vmatpush.msra.mxu0 %v975
    %1110 = vmatmul.f32.gmra.mxu0 %v1012
    %v1111 = vpop.f32.mrf.mxu0
    %v1112 = vadd.f32 0.0, %v1111
    %1113 = vdwg.mxu0
    %1114 = vmatpush.msra.mxu0 0.0
    %1115 = vmatpush.msra.mxu0 0.0
    %1116 = vmatpush.msra.mxu0 0.0
    %1117 = vmatpush.msra.mxu0 0.0
    %1118 = vmatpush.msra.mxu0 0.0
    %1119 = vmatpush.msra.mxu0 0.0
    %1120 = vmatpush.msra.mxu0 0.0
    %1121 = vmatpush.msra.mxu0 0.0
    %1122 = vmatpush.msra.mxu0 0.0
    %1123 = vmatpush.msra.mxu0 0.0
    %1124 = vmatpush.msra.mxu0 0.0
    %1125 = vmatpush.msra.mxu0 0.0
    %1126 = vmatpush.msra.mxu0 0.0
    %1127 = vmatpush.msra.mxu0 0.0
    %1128 = vmatpush.msra.mxu0 0.0
    %1129 = vmatpush.msra.mxu0 %v976
    %1130 = vmatmul.f32.gmra.mxu0 %v1012
    %v1131 = vpop.f32.mrf.mxu0
    %v1132 = vadd.f32 0.0, %v1131
    %1133 = vdwg.mxu0
    %1134 = vmatpush.msra.mxu0 0.0
    %1135 = vmatpush.msra.mxu0 0.0
    %1136 = vmatpush.msra.mxu0 0.0
    %1137 = vmatpush.msra.mxu0 0.0
    %1138 = vmatpush.msra.mxu0 0.0
    %1139 = vmatpush.msra.mxu0 0.0
    %1140 = vmatpush.msra.mxu0 0.0
    %1141 = vmatpush.msra.mxu0 0.0
    %1142 = vmatpush.msra.mxu0 0.0
    %1143 = vmatpush.msra.mxu0 0.0
    %1144 = vmatpush.msra.mxu0 0.0
    %1145 = vmatpush.msra.mxu0 0.0
    %1146 = vmatpush.msra.mxu0 0.0
    %1147 = vmatpush.msra.mxu0 0.0
    %1148 = vmatpush.msra.mxu0 0.0
    %1149 = vmatpush.msra.mxu0 %v977
    %1150 = vmatmul.f32.gmra.mxu0 %v1012
    %v1151 = vpop.f32.mrf.mxu0
    %v1152 = vadd.f32 0.0, %v1151
    %1153 = vdwg.mxu0
    %1154 = vmatpush.msra.mxu0 0.0
    %1155 = vmatpush.msra.mxu0 0.0
    %1156 = vmatpush.msra.mxu0 0.0
    %1157 = vmatpush.msra.mxu0 0.0
    %1158 = vmatpush.msra.mxu0 0.0
    %1159 = vmatpush.msra.mxu0 0.0
    %1160 = vmatpush.msra.mxu0 0.0
    %1161 = vmatpush.msra.mxu0 0.0
    %1162 = vmatpush.msra.mxu0 0.0
    %1163 = vmatpush.msra.mxu0 0.0
    %1164 = vmatpush.msra.mxu0 0.0
    %1165 = vmatpush.msra.mxu0 0.0
    %1166 = vmatpush.msra.mxu0 0.0
    %1167 = vmatpush.msra.mxu0 0.0
    %1168 = vmatpush.msra.mxu0 0.0
    %1169 = vmatpush.msra.mxu0 %v978
    %1170 = vmatmul.f32.gmra.mxu0 %v1012
    %v1171 = vpop.f32.mrf.mxu0
    %v1172 = vadd.f32 0.0, %v1171
    %1173 = vdwg.mxu0
    %v1175 = vsel %vm196, %v31, 0
    %1177 = vmatpush.msra.mxu0 0.0
    %1178 = vmatpush.msra.mxu0 0.0
    %1179 = vmatpush.msra.mxu0 0.0
    %1180 = vmatpush.msra.mxu0 0.0
    %1181 = vmatpush.msra.mxu0 0.0
    %1182 = vmatpush.msra.mxu0 0.0
    %1183 = vmatpush.msra.mxu0 0.0
    %1184 = vmatpush.msra.mxu0 0.0
    %1185 = vmatpush.msra.mxu0 0.0
    %1186 = vmatpush.msra.mxu0 0.0
    %1187 = vmatpush.msra.mxu0 0.0
    %1188 = vmatpush.msra.mxu0 0.0
    %1189 = vmatpush.msra.mxu0 0.0
    %1190 = vmatpush.msra.mxu0 0.0
    %1191 = vmatpush.msra.mxu0 0.0
    %1192 = vmatpush.msra.mxu0 %v1003
    %1193 = vmatmul.f32.gmra.mxu0 %v1175
    %v1194 = vpop.f32.mrf.mxu0
    %v1195 = vadd.f32 %v1032, %v1194
    %1196 = vdwg.mxu0
    %1197 = vmatpush.msra.mxu0 0.0
    %1198 = vmatpush.msra.mxu0 0.0
    %1199 = vmatpush.msra.mxu0 0.0
    %1200 = vmatpush.msra.mxu0 0.0
    %1201 = vmatpush.msra.mxu0 0.0
    %1202 = vmatpush.msra.mxu0 0.0
    %1203 = vmatpush.msra.mxu0 0.0
    %1204 = vmatpush.msra.mxu0 0.0
    %1205 = vmatpush.msra.mxu0 0.0
    %1206 = vmatpush.msra.mxu0 0.0
    %1207 = vmatpush.msra.mxu0 0.0
    %1208 = vmatpush.msra.mxu0 0.0
    %1209 = vmatpush.msra.mxu0 0.0
    %1210 = vmatpush.msra.mxu0 0.0
    %1211 = vmatpush.msra.mxu0 0.0
    %1212 = vmatpush.msra.mxu0 %v1004
    %1213 = vmatmul.f32.gmra.mxu0 %v1175
    %v1214 = vpop.f32.mrf.mxu0
    %v1215 = vadd.f32 %v1052, %v1214
    %1216 = vdwg.mxu0
    %1217 = vmatpush.msra.mxu0 0.0
    %1218 = vmatpush.msra.mxu0 0.0
    %1219 = vmatpush.msra.mxu0 0.0
    %1220 = vmatpush.msra.mxu0 0.0
    %1221 = vmatpush.msra.mxu0 0.0
    %1222 = vmatpush.msra.mxu0 0.0
    %1223 = vmatpush.msra.mxu0 0.0
    %1224 = vmatpush.msra.mxu0 0.0
    %1225 = vmatpush.msra.mxu0 0.0
    %1226 = vmatpush.msra.mxu0 0.0
    %1227 = vmatpush.msra.mxu0 0.0
    %1228 = vmatpush.msra.mxu0 0.0
    %1229 = vmatpush.msra.mxu0 0.0
    %1230 = vmatpush.msra.mxu0 0.0
    %1231 = vmatpush.msra.mxu0 0.0
    %1232 = vmatpush.msra.mxu0 %v1005
    %1233 = vmatmul.f32.gmra.mxu0 %v1175
    %v1234 = vpop.f32.mrf.mxu0
    %v1235 = vadd.f32 %v1072, %v1234
    %1236 = vdwg.mxu0
    %1237 = vmatpush.msra.mxu0 0.0
    %1238 = vmatpush.msra.mxu0 0.0
    %1239 = vmatpush.msra.mxu0 0.0
    %1240 = vmatpush.msra.mxu0 0.0
    %1241 = vmatpush.msra.mxu0 0.0
    %1242 = vmatpush.msra.mxu0 0.0
    %1243 = vmatpush.msra.mxu0 0.0
    %1244 = vmatpush.msra.mxu0 0.0
    %1245 = vmatpush.msra.mxu0 0.0
    %1246 = vmatpush.msra.mxu0 0.0
    %1247 = vmatpush.msra.mxu0 0.0
    %1248 = vmatpush.msra.mxu0 0.0
    %1249 = vmatpush.msra.mxu0 0.0
    %1250 = vmatpush.msra.mxu0 0.0
    %1251 = vmatpush.msra.mxu0 0.0
    %1252 = vmatpush.msra.mxu0 %v1006
    %1253 = vmatmul.f32.gmra.mxu0 %v1175
    %v1254 = vpop.f32.mrf.mxu0
    %v1255 = vadd.f32 %v1092, %v1254
    %1256 = vdwg.mxu0
    %1257 = vmatpush.msra.mxu0 0.0
    %1258 = vmatpush.msra.mxu0 0.0
    %1259 = vmatpush.msra.mxu0 0.0
    %1260 = vmatpush.msra.mxu0 0.0
    %1261 = vmatpush.msra.mxu0 0.0
    %1262 = vmatpush.msra.mxu0 0.0
    %1263 = vmatpush.msra.mxu0 0.0
    %1264 = vmatpush.msra.mxu0 0.0
    %1265 = vmatpush.msra.mxu0 0.0
    %1266 = vmatpush.msra.mxu0 0.0
    %1267 = vmatpush.msra.mxu0 0.0
    %1268 = vmatpush.msra.mxu0 0.0
    %1269 = vmatpush.msra.mxu0 0.0
    %1270 = vmatpush.msra.mxu0 0.0
    %1271 = vmatpush.msra.mxu0 0.0
    %1272 = vmatpush.msra.mxu0 %v1007
    %1273 = vmatmul.f32.gmra.mxu0 %v1175
    %v1274 = vpop.f32.mrf.mxu0
    %v1275 = vadd.f32 %v1112, %v1274
    %1276 = vdwg.mxu0
    %1277 = vmatpush.msra.mxu0 0.0
    %1278 = vmatpush.msra.mxu0 0.0
    %1279 = vmatpush.msra.mxu0 0.0
    %1280 = vmatpush.msra.mxu0 0.0
    %1281 = vmatpush.msra.mxu0 0.0
    %1282 = vmatpush.msra.mxu0 0.0
    %1283 = vmatpush.msra.mxu0 0.0
    %1284 = vmatpush.msra.mxu0 0.0
    %1285 = vmatpush.msra.mxu0 0.0
    %1286 = vmatpush.msra.mxu0 0.0
    %1287 = vmatpush.msra.mxu0 0.0
    %1288 = vmatpush.msra.mxu0 0.0
    %1289 = vmatpush.msra.mxu0 0.0
    %1290 = vmatpush.msra.mxu0 0.0
    %1291 = vmatpush.msra.mxu0 0.0
    %1292 = vmatpush.msra.mxu0 %v1008
    %1293 = vmatmul.f32.gmra.mxu0 %v1175
    %v1294 = vpop.f32.mrf.mxu0
    %v1295 = vadd.f32 %v1132, %v1294
    %1296 = vdwg.mxu0
    %1297 = vmatpush.msra.mxu0 0.0
    %1298 = vmatpush.msra.mxu0 0.0
    %1299 = vmatpush.msra.mxu0 0.0
    %1300 = vmatpush.msra.mxu0 0.0
    %1301 = vmatpush.msra.mxu0 0.0
    %1302 = vmatpush.msra.mxu0 0.0
    %1303 = vmatpush.msra.mxu0 0.0
    %1304 = vmatpush.msra.mxu0 0.0
    %1305 = vmatpush.msra.mxu0 0.0
    %1306 = vmatpush.msra.mxu0 0.0
    %1307 = vmatpush.msra.mxu0 0.0
    %1308 = vmatpush.msra.mxu0 0.0
    %1309 = vmatpush.msra.mxu0 0.0
    %1310 = vmatpush.msra.mxu0 0.0
    %1311 = vmatpush.msra.mxu0 0.0
    %1312 = vmatpush.msra.mxu0 %v1009
    %1313 = vmatmul.f32.gmra.mxu0 %v1175
    %v1314 = vpop.f32.mrf.mxu0
    %v1315 = vadd.f32 %v1152, %v1314
    %1316 = vdwg.mxu0
    %1317 = vmatpush.msra.mxu0 0.0
    %1318 = vmatpush.msra.mxu0 0.0
    %1319 = vmatpush.msra.mxu0 0.0
    %1320 = vmatpush.msra.mxu0 0.0
    %1321 = vmatpush.msra.mxu0 0.0
    %1322 = vmatpush.msra.mxu0 0.0
    %1323 = vmatpush.msra.mxu0 0.0
    %1324 = vmatpush.msra.mxu0 0.0
    %1325 = vmatpush.msra.mxu0 0.0
    %1326 = vmatpush.msra.mxu0 0.0
    %1327 = vmatpush.msra.mxu0 0.0
    %1328 = vmatpush.msra.mxu0 0.0
    %1329 = vmatpush.msra.mxu0 0.0
    %1330 = vmatpush.msra.mxu0 0.0
    %1331 = vmatpush.msra.mxu0 0.0
    %1332 = vmatpush.msra.mxu0 %v1010
    %1333 = vmatmul.f32.gmra.mxu0 %v1175
    %v1334 = vpop.f32.mrf.mxu0
    %v1335 = vadd.f32 %v1172, %v1334
    %1336 = vdwg.mxu0
    %1337 = vset.pattern.permute.xlu0 7
    %1338 = vperm.xlu0 %1337, %v25
    %v1339 = vpop.permute.xlu0 %1338
    %v1341 = vadd.f32 %v1195, %v1339
    %v1342 = vadd.f32 %v1215, %v1339
    %v1343 = vadd.f32 %v1235, %v1339
    %v1344 = vadd.f32 %v1255, %v1339
    %v1345 = vadd.f32 %v1275, %v1339
    %v1346 = vadd.f32 %v1295, %v1339
    %v1347 = vadd.f32 %v1315, %v1339
    %v1348 = vadd.f32 %v1335, %v1339
    %v1349 = vmax.f32 %v1341, 0.0
    %v1350 = vmax.f32 %v1342, 0.0
    %v1351 = vmax.f32 %v1343, 0.0
    %v1352 = vmax.f32 %v1344, 0.0
    %v1353 = vmax.f32 %v1345, 0.0
    %v1354 = vmax.f32 %v1346, 0.0
    %v1355 = vmax.f32 %v1347, 0.0
    %v1356 = vmax.f32 %v1348, 0.0
    %v1358 = vsel %vm196, %v33, 0
    %1360 = vmatpush.msra.mxu0 0.0
    %1361 = vmatpush.msra.mxu0 0.0
    %1362 = vmatpush.msra.mxu0 0.0
    %1363 = vmatpush.msra.mxu0 0.0
    %1364 = vmatpush.msra.mxu0 0.0
    %1365 = vmatpush.msra.mxu0 0.0
    %1366 = vmatpush.msra.mxu0 0.0
    %1367 = vmatpush.msra.mxu0 0.0
    %1368 = vmatpush.msra.mxu0 0.0
    %1369 = vmatpush.msra.mxu0 0.0
    %1370 = vmatpush.msra.mxu0 0.0
    %1371 = vmatpush.msra.mxu0 0.0
    %1372 = vmatpush.msra.mxu0 0.0
    %1373 = vmatpush.msra.mxu0 0.0
    %1374 = vmatpush.msra.mxu0 0.0
    %1375 = vmatpush.msra.mxu0 %v575
    %1376 = vmatmul.f32.gmra.mxu0 %v1358
    %v1377 = vpop.f32.mrf.mxu0
    %v1378 = vadd.f32 0.0, %v1377
    %1379 = vdwg.mxu0
    %1380 = vmatpush.msra.mxu0 0.0
    %1381 = vmatpush.msra.mxu0 0.0
    %1382 = vmatpush.msra.mxu0 0.0
    %1383 = vmatpush.msra.mxu0 0.0
    %1384 = vmatpush.msra.mxu0 0.0
    %1385 = vmatpush.msra.mxu0 0.0
    %1386 = vmatpush.msra.mxu0 0.0
    %1387 = vmatpush.msra.mxu0 0.0
    %1388 = vmatpush.msra.mxu0 0.0
    %1389 = vmatpush.msra.mxu0 0.0
    %1390 = vmatpush.msra.mxu0 0.0
    %1391 = vmatpush.msra.mxu0 0.0
    %1392 = vmatpush.msra.mxu0 0.0
    %1393 = vmatpush.msra.mxu0 0.0
    %1394 = vmatpush.msra.mxu0 0.0
    %1395 = vmatpush.msra.mxu0 %v576
    %1396 = vmatmul.f32.gmra.mxu0 %v1358
    %v1397 = vpop.f32.mrf.mxu0
    %v1398 = vadd.f32 0.0, %v1397
    %1399 = vdwg.mxu0
    %1400 = vmatpush.msra.mxu0 0.0
    %1401 = vmatpush.msra.mxu0 0.0
    %1402 = vmatpush.msra.mxu0 0.0
    %1403 = vmatpush.msra.mxu0 0.0
    %1404 = vmatpush.msra.mxu0 0.0
    %1405 = vmatpush.msra.mxu0 0.0
    %1406 = vmatpush.msra.mxu0 0.0
    %1407 = vmatpush.msra.mxu0 0.0
    %1408 = vmatpush.msra.mxu0 0.0
    %1409 = vmatpush.msra.mxu0 0.0
    %1410 = vmatpush.msra.mxu0 0.0
    %1411 = vmatpush.msra.mxu0 0.0
    %1412 = vmatpush.msra.mxu0 0.0
    %1413 = vmatpush.msra.mxu0 0.0
    %1414 = vmatpush.msra.mxu0 0.0
    %1415 = vmatpush.msra.mxu0 %v577
    %1416 = vmatmul.f32.gmra.mxu0 %v1358
    %v1417 = vpop.f32.mrf.mxu0
    %v1418 = vadd.f32 0.0, %v1417
    %1419 = vdwg.mxu0
    %1420 = vmatpush.msra.mxu0 0.0
    %1421 = vmatpush.msra.mxu0 0.0
    %1422 = vmatpush.msra.mxu0 0.0
    %1423 = vmatpush.msra.mxu0 0.0
    %1424 = vmatpush.msra.mxu0 0.0
    %1425 = vmatpush.msra.mxu0 0.0
    %1426 = vmatpush.msra.mxu0 0.0
    %1427 = vmatpush.msra.mxu0 0.0
    %1428 = vmatpush.msra.mxu0 0.0
    %1429 = vmatpush.msra.mxu0 0.0
    %1430 = vmatpush.msra.mxu0 0.0
    %1431 = vmatpush.msra.mxu0 0.0
    %1432 = vmatpush.msra.mxu0 0.0
    %1433 = vmatpush.msra.mxu0 0.0
    %1434 = vmatpush.msra.mxu0 0.0
    %1435 = vmatpush.msra.mxu0 %v578
    %1436 = vmatmul.f32.gmra.mxu0 %v1358
    %v1437 = vpop.f32.mrf.mxu0
    %v1438 = vadd.f32 0.0, %v1437
    %1439 = vdwg.mxu0
    %1440 = vmatpush.msra.mxu0 0.0
    %1441 = vmatpush.msra.mxu0 0.0
    %1442 = vmatpush.msra.mxu0 0.0
    %1443 = vmatpush.msra.mxu0 0.0
    %1444 = vmatpush.msra.mxu0 0.0
    %1445 = vmatpush.msra.mxu0 0.0
    %1446 = vmatpush.msra.mxu0 0.0
    %1447 = vmatpush.msra.mxu0 0.0
    %1448 = vmatpush.msra.mxu0 0.0
    %1449 = vmatpush.msra.mxu0 0.0
    %1450 = vmatpush.msra.mxu0 0.0
    %1451 = vmatpush.msra.mxu0 0.0
    %1452 = vmatpush.msra.mxu0 0.0
    %1453 = vmatpush.msra.mxu0 0.0
    %1454 = vmatpush.msra.mxu0 0.0
    %1455 = vmatpush.msra.mxu0 %v579
    %1456 = vmatmul.f32.gmra.mxu0 %v1358
    %v1457 = vpop.f32.mrf.mxu0
    %v1458 = vadd.f32 0.0, %v1457
    %1459 = vdwg.mxu0
    %1460 = vmatpush.msra.mxu0 0.0
    %1461 = vmatpush.msra.mxu0 0.0
    %1462 = vmatpush.msra.mxu0 0.0
    %1463 = vmatpush.msra.mxu0 0.0
    %1464 = vmatpush.msra.mxu0 0.0
    %1465 = vmatpush.msra.mxu0 0.0
    %1466 = vmatpush.msra.mxu0 0.0
    %1467 = vmatpush.msra.mxu0 0.0
    %1468 = vmatpush.msra.mxu0 0.0
    %1469 = vmatpush.msra.mxu0 0.0
    %1470 = vmatpush.msra.mxu0 0.0
    %1471 = vmatpush.msra.mxu0 0.0
    %1472 = vmatpush.msra.mxu0 0.0
    %1473 = vmatpush.msra.mxu0 0.0
    %1474 = vmatpush.msra.mxu0 0.0
    %1475 = vmatpush.msra.mxu0 %v580
    %1476 = vmatmul.f32.gmra.mxu0 %v1358
    %v1477 = vpop.f32.mrf.mxu0
    %v1478 = vadd.f32 0.0, %v1477
    %1479 = vdwg.mxu0
    %1480 = vmatpush.msra.mxu0 0.0
    %1481 = vmatpush.msra.mxu0 0.0
    %1482 = vmatpush.msra.mxu0 0.0
    %1483 = vmatpush.msra.mxu0 0.0
    %1484 = vmatpush.msra.mxu0 0.0
    %1485 = vmatpush.msra.mxu0 0.0
    %1486 = vmatpush.msra.mxu0 0.0
    %1487 = vmatpush.msra.mxu0 0.0
    %1488 = vmatpush.msra.mxu0 0.0
    %1489 = vmatpush.msra.mxu0 0.0
    %1490 = vmatpush.msra.mxu0 0.0
    %1491 = vmatpush.msra.mxu0 0.0
    %1492 = vmatpush.msra.mxu0 0.0
    %1493 = vmatpush.msra.mxu0 0.0
    %1494 = vmatpush.msra.mxu0 0.0
    %1495 = vmatpush.msra.mxu0 %v581
    %1496 = vmatmul.f32.gmra.mxu0 %v1358
    %v1497 = vpop.f32.mrf.mxu0
    %v1498 = vadd.f32 0.0, %v1497
    %1499 = vdwg.mxu0
    %1500 = vmatpush.msra.mxu0 0.0
    %1501 = vmatpush.msra.mxu0 0.0
    %1502 = vmatpush.msra.mxu0 0.0
    %1503 = vmatpush.msra.mxu0 0.0
    %1504 = vmatpush.msra.mxu0 0.0
    %1505 = vmatpush.msra.mxu0 0.0
    %1506 = vmatpush.msra.mxu0 0.0
    %1507 = vmatpush.msra.mxu0 0.0
    %1508 = vmatpush.msra.mxu0 0.0
    %1509 = vmatpush.msra.mxu0 0.0
    %1510 = vmatpush.msra.mxu0 0.0
    %1511 = vmatpush.msra.mxu0 0.0
    %1512 = vmatpush.msra.mxu0 0.0
    %1513 = vmatpush.msra.mxu0 0.0
    %1514 = vmatpush.msra.mxu0 0.0
    %1515 = vmatpush.msra.mxu0 %v582
    %1516 = vmatmul.f32.gmra.mxu0 %v1358
    %v1517 = vpop.f32.mrf.mxu0
    %v1518 = vadd.f32 0.0, %v1517
    %1519 = vdwg.mxu0
    %v1520 = vadd.f32 %v1349, %v1378
    %v1521 = vadd.f32 %v1350, %v1398
    %v1522 = vadd.f32 %v1351, %v1418
    %v1523 = vadd.f32 %v1352, %v1438
    %v1524 = vadd.f32 %v1353, %v1458
    %v1525 = vadd.f32 %v1354, %v1478
    %v1526 = vadd.f32 %v1355, %v1498
    %v1527 = vadd.f32 %v1356, %v1518
    %1528 = vset.pattern.permute.xlu0 8
    %1529 = vperm.xlu0 %1528, %v25
    %v1530 = vpop.permute.xlu0 %1529
    %v1532 = vadd.f32 %v1520, %v1530
    %v1533 = vadd.f32 %v1521, %v1530
    %v1534 = vadd.f32 %v1522, %v1530
    %v1535 = vadd.f32 %v1523, %v1530
    %v1536 = vadd.f32 %v1524, %v1530
    %v1537 = vadd.f32 %v1525, %v1530
    %v1538 = vadd.f32 %v1526, %v1530
    %v1539 = vadd.f32 %v1527, %v1530
    %v1540 = vmax.f32 %v1532, 0.0
    %v1541 = vmax.f32 %v1533, 0.0
    %v1542 = vmax.f32 %v1534, 0.0
    %v1543 = vmax.f32 %v1535, 0.0
    %v1544 = vmax.f32 %v1536, 0.0
    %v1545 = vmax.f32 %v1537, 0.0
    %v1546 = vmax.f32 %v1538, 0.0
    %v1547 = vmax.f32 %v1539, 0.0
    %v1548 = vld [vmem:[%s4] sm:$0xff]
    %v1549 = vld [vmem:[%s4 + $0x8] sm:$0xff]
    %v1550 = vld [vmem:[%s4 + $0x10] sm:$0xff]
    %v1551 = vld [vmem:[%s4 + $0x18] sm:$0xff]
    %v1552 = vld [vmem:[%s4 + $0x20] sm:$0xff]
    %v1553 = vld [vmem:[%s4 + $0x28] sm:$0xff]
    %v1554 = vld [vmem:[%s4 + $0x30] sm:$0xff]
    %v1555 = vld [vmem:[%s4 + $0x38] sm:$0xff]
    %v1556 = vld [vmem:[%s4 + $0x40] sm:$0xff]
    %v1557 = vld [vmem:[%s4 + $0x48] sm:$0xff]
    %v1558 = vld [vmem:[%s4 + $0x50] sm:$0xff]
    %v1559 = vld [vmem:[%s4 + $0x58] sm:$0xff]
    %v1560 = vld [vmem:[%s4 + $0x60] sm:$0xff]
    %v1561 = vld [vmem:[%s4 + $0x68] sm:$0xff]
    %v1562 = vld [vmem:[%s4 + $0x70] sm:$0xff]
    %v1563 = vld [vmem:[%s4 + $0x78] sm:$0xff]
    %v1564 = vld [vmem:[%s4 + $0x80] sm:$0xff]
    %v1565 = vld [vmem:[%s4 + $0x88] sm:$0xff]
    %v1566 = vld [vmem:[%s4 + $0x90] sm:$0xff]
    %v1567 = vld [vmem:[%s4 + $0x98] sm:$0xff]
    %v1568 = vld [vmem:[%s4 + $0xa0] sm:$0xff]
    %v1569 = vld [vmem:[%s4 + $0xa8] sm:$0xff]
    %v1570 = vld [vmem:[%s4 + $0xb0] sm:$0xff]
    %v1571 = vld [vmem:[%s4 + $0xb8] sm:$0xff]
    %v1572 = vld [vmem:[%s4 + $0xc0] sm:$0xff]
    %v1573 = vld [vmem:[%s4 + $0xc8] sm:$0xff]
    %v1574 = vld [vmem:[%s4 + $0xd0] sm:$0xff]
    %v1575 = vld [vmem:[%s4 + $0xd8] sm:$0xff]
    %v1576 = vld [vmem:[%s4 + $0xe0] sm:$0xff]
    %v1577 = vld [vmem:[%s4 + $0xe8] sm:$0xff]
    %v1578 = vld [vmem:[%s4 + $0xf0] sm:$0xff]
    %v1579 = vld [vmem:[%s4 + $0xf8] sm:$0xff]
    %v1580 = vld [vmem:[%s4 + $0x100] sm:$0xff]
    %v1581 = vld [vmem:[%s4 + $0x108] sm:$0xff]
    %v1582 = vld [vmem:[%s4 + $0x110] sm:$0xff]
    %v1583 = vld [vmem:[%s4 + $0x118] sm:$0xff]
    %v1584 = vld [vmem:[%s4 + $0x120] sm:$0xff]
    %v1585 = vld [vmem:[%s4 + $0x128] sm:$0xff]
    %v1586 = vld [vmem:[%s4 + $0x130] sm:$0xff]
    %v1587 = vld [vmem:[%s4 + $0x138] sm:$0xff]
    %v1588 = vld [vmem:[%s4 + $0x140] sm:$0xff]
    %v1589 = vld [vmem:[%s4 + $0x148] sm:$0xff]
    %v1590 = vld [vmem:[%s4 + $0x150] sm:$0xff]
    %v1591 = vld [vmem:[%s4 + $0x158] sm:$0xff]
    %v1592 = vld [vmem:[%s4 + $0x160] sm:$0xff]
    %v1593 = vld [vmem:[%s4 + $0x168] sm:$0xff]
    %v1594 = vld [vmem:[%s4 + $0x170] sm:$0xff]
    %v1595 = vld [vmem:[%s4 + $0x178] sm:$0xff]
    %v1596 = vld [vmem:[%s4 + $0x180] sm:$0xff]
    %v1597 = vld [vmem:[%s4 + $0x188] sm:$0xff]
    %v1598 = vld [vmem:[%s4 + $0x190] sm:$0xff]
    %v1599 = vld [vmem:[%s4 + $0x198] sm:$0xff]
    %v1600 = vld [vmem:[%s4 + $0x1a0] sm:$0xff]
    %v1601 = vld [vmem:[%s4 + $0x1a8] sm:$0xff]
    %v1602 = vld [vmem:[%s4 + $0x1b0] sm:$0xff]
    %v1603 = vld [vmem:[%s4 + $0x1b8] sm:$0xff]
    %v1604 = vld [vmem:[%s4 + $0x1c0] sm:$0xff]
    %v1605 = vld [vmem:[%s4 + $0x1c8] sm:$0xff]
    %v1606 = vld [vmem:[%s4 + $0x1d0] sm:$0xff]
    %v1607 = vld [vmem:[%s4 + $0x1d8] sm:$0xff]
    %v1608 = vld [vmem:[%s4 + $0x1e0] sm:$0xff]
    %v1609 = vld [vmem:[%s4 + $0x1e8] sm:$0xff]
    %v1610 = vld [vmem:[%s4 + $0x1f0] sm:$0xff]
    %v1611 = vld [vmem:[%s4 + $0x1f8] sm:$0xff]
    %v1612 = vld [vmem:[%s4 + $0x200] sm:$0xff]
    %v1613 = vld [vmem:[%s4 + $0x208] sm:$0xff]
    %v1614 = vld [vmem:[%s4 + $0x210] sm:$0xff]
    %v1615 = vld [vmem:[%s4 + $0x218] sm:$0xff]
    %v1616 = vld [vmem:[%s4 + $0x220] sm:$0xff]
    %v1617 = vld [vmem:[%s4 + $0x228] sm:$0xff]
    %v1618 = vld [vmem:[%s4 + $0x230] sm:$0xff]
    %v1619 = vld [vmem:[%s4 + $0x238] sm:$0xff]
    %v1620 = vld [vmem:[%s4 + $0x240] sm:$0xff]
    %v1621 = vld [vmem:[%s4 + $0x248] sm:$0xff]
    %v1622 = vld [vmem:[%s4 + $0x250] sm:$0xff]
    %v1623 = vld [vmem:[%s4 + $0x258] sm:$0xff]
    %v1624 = vld [vmem:[%s4 + $0x260] sm:$0xff]
    %v1625 = vld [vmem:[%s4 + $0x268] sm:$0xff]
    %v1626 = vld [vmem:[%s4 + $0x270] sm:$0xff]
    %v1627 = vld [vmem:[%s4 + $0x278] sm:$0xff]
    %v1628 = vld [vmem:[%s4 + $0x280] sm:$0xff]
    %v1629 = vld [vmem:[%s4 + $0x288] sm:$0xff]
    %v1630 = vld [vmem:[%s4 + $0x290] sm:$0xff]
    %v1631 = vld [vmem:[%s4 + $0x298] sm:$0xff]
    %v1632 = vld [vmem:[%s4 + $0x2a0] sm:$0xff]
    %v1633 = vld [vmem:[%s4 + $0x2a8] sm:$0xff]
    %v1634 = vld [vmem:[%s4 + $0x2b0] sm:$0xff]
    %v1635 = vld [vmem:[%s4 + $0x2b8] sm:$0xff]
    %v1636 = vld [vmem:[%s4 + $0x2c0] sm:$0xff]
    %v1637 = vld [vmem:[%s4 + $0x2c8] sm:$0xff]
    %v1638 = vld [vmem:[%s4 + $0x2d0] sm:$0xff]
    %v1639 = vld [vmem:[%s4 + $0x2d8] sm:$0xff]
    %v1640 = vld [vmem:[%s4 + $0x2e0] sm:$0xff]
    %v1641 = vld [vmem:[%s4 + $0x2e8] sm:$0xff]
    %v1642 = vld [vmem:[%s4 + $0x2f0] sm:$0xff]
    %v1643 = vld [vmem:[%s4 + $0x2f8] sm:$0xff]
    %v1644 = vld [vmem:[%s4 + $0x300] sm:$0xff]
    %v1645 = vld [vmem:[%s4 + $0x308] sm:$0xff]
    %v1646 = vld [vmem:[%s4 + $0x310] sm:$0xff]
    %v1647 = vld [vmem:[%s4 + $0x318] sm:$0xff]
    %v1648 = vld [vmem:[%s4 + $0x320] sm:$0xff]
    %v1649 = vld [vmem:[%s4 + $0x328] sm:$0xff]
    %v1650 = vld [vmem:[%s4 + $0x330] sm:$0xff]
    %v1651 = vld [vmem:[%s4 + $0x338] sm:$0xff]
    %v1652 = vld [vmem:[%s4 + $0x340] sm:$0xff]
    %v1653 = vld [vmem:[%s4 + $0x348] sm:$0xff]
    %v1654 = vld [vmem:[%s4 + $0x350] sm:$0xff]
    %v1655 = vld [vmem:[%s4 + $0x358] sm:$0xff]
    %v1656 = vld [vmem:[%s4 + $0x360] sm:$0xff]
    %v1657 = vld [vmem:[%s4 + $0x368] sm:$0xff]
    %v1658 = vld [vmem:[%s4 + $0x370] sm:$0xff]
    %v1659 = vld [vmem:[%s4 + $0x378] sm:$0xff]
    %v1660 = vld [vmem:[%s4 + $0x380] sm:$0xff]
    %v1661 = vld [vmem:[%s4 + $0x388] sm:$0xff]
    %v1662 = vld [vmem:[%s4 + $0x390] sm:$0xff]
    %v1663 = vld [vmem:[%s4 + $0x398] sm:$0xff]
    %v1664 = vld [vmem:[%s4 + $0x3a0] sm:$0xff]
    %v1665 = vld [vmem:[%s4 + $0x3a8] sm:$0xff]
    %v1666 = vld [vmem:[%s4 + $0x3b0] sm:$0xff]
    %v1667 = vld [vmem:[%s4 + $0x3b8] sm:$0xff]
    %v1668 = vld [vmem:[%s4 + $0x3c0] sm:$0xff]
    %v1669 = vld [vmem:[%s4 + $0x3c8] sm:$0xff]
    %v1670 = vld [vmem:[%s4 + $0x3d0] sm:$0xff]
    %v1671 = vld [vmem:[%s4 + $0x3d8] sm:$0xff]
    %v1672 = vld [vmem:[%s4 + $0x3e0] sm:$0xff]
    %v1673 = vld [vmem:[%s4 + $0x3e8] sm:$0xff]
    %v1674 = vld [vmem:[%s4 + $0x3f0] sm:$0xff]
    %v1675 = vld [vmem:[%s4 + $0x3f8] sm:$0xff]
    %1677 = vset.pattern.permute.xlu0 9
    %1678 = vperm.xlu0 %1677, %v26
    %v1679 = vpop.permute.xlu0 %1678
    %1681 = vmatpush.msra.mxu0 %v1563
    %1682 = vmatpush.msra.mxu0 %v1562
    %1683 = vmatpush.msra.mxu0 %v1561
    %1684 = vmatpush.msra.mxu0 %v1560
    %1685 = vmatpush.msra.mxu0 %v1559
    %1686 = vmatpush.msra.mxu0 %v1558
    %1687 = vmatpush.msra.mxu0 %v1557
    %1688 = vmatpush.msra.mxu0 %v1556
    %1689 = vmatpush.msra.mxu0 %v1555
    %1690 = vmatpush.msra.mxu0 %v1554
    %1691 = vmatpush.msra.mxu0 %v1553
    %1692 = vmatpush.msra.mxu0 %v1552
    %1693 = vmatpush.msra.mxu0 %v1551
    %1694 = vmatpush.msra.mxu0 %v1550
    %1695 = vmatpush.msra.mxu0 %v1549
    %1696 = vmatpush.msra.mxu0 %v1548
    %1697 = vmatmul.f32.gmra.mxu0 %v1540
    %v1698 = vpop.f32.mrf.mxu0
    %v1699 = vadd.f32 %v1679, %v1698
    %1700 = vdwg.mxu0
    %1701 = vmatpush.msra.mxu0 %v1579
    %1702 = vmatpush.msra.mxu0 %v1578
    %1703 = vmatpush.msra.mxu0 %v1577
    %1704 = vmatpush.msra.mxu0 %v1576
    %1705 = vmatpush.msra.mxu0 %v1575
    %1706 = vmatpush.msra.mxu0 %v1574
    %1707 = vmatpush.msra.mxu0 %v1573
    %1708 = vmatpush.msra.mxu0 %v1572
    %1709 = vmatpush.msra.mxu0 %v1571
    %1710 = vmatpush.msra.mxu0 %v1570
    %1711 = vmatpush.msra.mxu0 %v1569
    %1712 = vmatpush.msra.mxu0 %v1568
    %1713 = vmatpush.msra.mxu0 %v1567
    %1714 = vmatpush.msra.mxu0 %v1566
    %1715 = vmatpush.msra.mxu0 %v1565
    %1716 = vmatpush.msra.mxu0 %v1564
    %1717 = vmatmul.f32.gmra.mxu0 %v1541
    %v1718 = vpop.f32.mrf.mxu0
    %v1719 = vadd.f32 %v1699, %v1718
    %1720 = vdwg.mxu0
    %1721 = vmatpush.msra.mxu0 %v1595
    %1722 = vmatpush.msra.mxu0 %v1594
    %1723 = vmatpush.msra.mxu0 %v1593
    %1724 = vmatpush.msra.mxu0 %v1592
    %1725 = vmatpush.msra.mxu0 %v1591
    %1726 = vmatpush.msra.mxu0 %v1590
    %1727 = vmatpush.msra.mxu0 %v1589
    %1728 = vmatpush.msra.mxu0 %v1588
    %1729 = vmatpush.msra.mxu0 %v1587
    %1730 = vmatpush.msra.mxu0 %v1586
    %1731 = vmatpush.msra.mxu0 %v1585
    %1732 = vmatpush.msra.mxu0 %v1584
    %1733 = vmatpush.msra.mxu0 %v1583
    %1734 = vmatpush.msra.mxu0 %v1582
    %1735 = vmatpush.msra.mxu0 %v1581
    %1736 = vmatpush.msra.mxu0 %v1580
    %1737 = vmatmul.f32.gmra.mxu0 %v1542
    %v1738 = vpop.f32.mrf.mxu0
    %v1739 = vadd.f32 %v1719, %v1738
    %1740 = vdwg.mxu0
    %1741 = vmatpush.msra.mxu0 %v1611
    %1742 = vmatpush.msra.mxu0 %v1610
    %1743 = vmatpush.msra.mxu0 %v1609
    %1744 = vmatpush.msra.mxu0 %v1608
    %1745 = vmatpush.msra.mxu0 %v1607
    %1746 = vmatpush.msra.mxu0 %v1606
    %1747 = vmatpush.msra.mxu0 %v1605
    %1748 = vmatpush.msra.mxu0 %v1604
    %1749 = vmatpush.msra.mxu0 %v1603
    %1750 = vmatpush.msra.mxu0 %v1602
    %1751 = vmatpush.msra.mxu0 %v1601
    %1752 = vmatpush.msra.mxu0 %v1600
    %1753 = vmatpush.msra.mxu0 %v1599
    %1754 = vmatpush.msra.mxu0 %v1598
    %1755 = vmatpush.msra.mxu0 %v1597
    %1756 = vmatpush.msra.mxu0 %v1596
    %1757 = vmatmul.f32.gmra.mxu0 %v1543
    %v1758 = vpop.f32.mrf.mxu0
    %v1759 = vadd.f32 %v1739, %v1758
    %1760 = vdwg.mxu0
    %1761 = vmatpush.msra.mxu0 %v1627
    %1762 = vmatpush.msra.mxu0 %v1626
    %1763 = vmatpush.msra.mxu0 %v1625
    %1764 = vmatpush.msra.mxu0 %v1624
    %1765 = vmatpush.msra.mxu0 %v1623
    %1766 = vmatpush.msra.mxu0 %v1622
    %1767 = vmatpush.msra.mxu0 %v1621
    %1768 = vmatpush.msra.mxu0 %v1620
    %1769 = vmatpush.msra.mxu0 %v1619
    %1770 = vmatpush.msra.mxu0 %v1618
    %1771 = vmatpush.msra.mxu0 %v1617
    %1772 = vmatpush.msra.mxu0 %v1616
    %1773 = vmatpush.msra.mxu0 %v1615
    %1774 = vmatpush.msra.mxu0 %v1614
    %1775 = vmatpush.msra.mxu0 %v1613
    %1776 = vmatpush.msra.mxu0 %v1612
    %1777 = vmatmul.f32.gmra.mxu0 %v1544
    %v1778 = vpop.f32.mrf.mxu0
    %v1779 = vadd.f32 %v1759, %v1778
    %1780 = vdwg.mxu0
    %1781 = vmatpush.msra.mxu0 %v1643
    %1782 = vmatpush.msra.mxu0 %v1642
    %1783 = vmatpush.msra.mxu0 %v1641
    %1784 = vmatpush.msra.mxu0 %v1640
    %1785 = vmatpush.msra.mxu0 %v1639
    %1786 = vmatpush.msra.mxu0 %v1638
    %1787 = vmatpush.msra.mxu0 %v1637
    %1788 = vmatpush.msra.mxu0 %v1636
    %1789 = vmatpush.msra.mxu0 %v1635
    %1790 = vmatpush.msra.mxu0 %v1634
    %1791 = vmatpush.msra.mxu0 %v1633
    %1792 = vmatpush.msra.mxu0 %v1632
    %1793 = vmatpush.msra.mxu0 %v1631
    %1794 = vmatpush.msra.mxu0 %v1630
    %1795 = vmatpush.msra.mxu0 %v1629
    %1796 = vmatpush.msra.mxu0 %v1628
    %1797 = vmatmul.f32.gmra.mxu0 %v1545
    %v1798 = vpop.f32.mrf.mxu0
    %v1799 = vadd.f32 %v1779, %v1798
    %1800 = vdwg.mxu0
    %1801 = vmatpush.msra.mxu0 %v1659
    %1802 = vmatpush.msra.mxu0 %v1658
    %1803 = vmatpush.msra.mxu0 %v1657
    %1804 = vmatpush.msra.mxu0 %v1656
    %1805 = vmatpush.msra.mxu0 %v1655
    %1806 = vmatpush.msra.mxu0 %v1654
    %1807 = vmatpush.msra.mxu0 %v1653
    %1808 = vmatpush.msra.mxu0 %v1652
    %1809 = vmatpush.msra.mxu0 %v1651
    %1810 = vmatpush.msra.mxu0 %v1650
    %1811 = vmatpush.msra.mxu0 %v1649
    %1812 = vmatpush.msra.mxu0 %v1648
    %1813 = vmatpush.msra.mxu0 %v1647
    %1814 = vmatpush.msra.mxu0 %v1646
    %1815 = vmatpush.msra.mxu0 %v1645
    %1816 = vmatpush.msra.mxu0 %v1644
    %1817 = vmatmul.f32.gmra.mxu0 %v1546
    %v1818 = vpop.f32.mrf.mxu0
    %v1819 = vadd.f32 %v1799, %v1818
    %1820 = vdwg.mxu0
    %1821 = vmatpush.msra.mxu0 %v1675
    %1822 = vmatpush.msra.mxu0 %v1674
    %1823 = vmatpush.msra.mxu0 %v1673
    %1824 = vmatpush.msra.mxu0 %v1672
    %1825 = vmatpush.msra.mxu0 %v1671
    %1826 = vmatpush.msra.mxu0 %v1670
    %1827 = vmatpush.msra.mxu0 %v1669
    %1828 = vmatpush.msra.mxu0 %v1668
    %1829 = vmatpush.msra.mxu0 %v1667
    %1830 = vmatpush.msra.mxu0 %v1666
    %1831 = vmatpush.msra.mxu0 %v1665
    %1832 = vmatpush.msra.mxu0 %v1664
    %1833 = vmatpush.msra.mxu0 %v1663
    %1834 = vmatpush.msra.mxu0 %v1662
    %1835 = vmatpush.msra.mxu0 %v1661
    %1836 = vmatpush.msra.mxu0 %v1660
    %1837 = vmatmul.f32.gmra.mxu0 %v1547
    %v1838 = vpop.f32.mrf.mxu0
    %v1839 = vadd.f32 %v1819, %v1838
    %1840 = vdwg.mxu0
    %vm1841 = vcmask 57344
    %1842 = vst.msk [vmem:[#allocation2] sm:$0x1] %vm1841, %v1839
    // Predicated region
    $region22: #{tpu_custom_call.1} parent=1 // pred_check
      _
    $region23: #{tpu_custom_call.1} parent=1 // pred_check_branch
      %1844 = sbr.rel (0) target = $region25
    $region24: #{tpu_custom_call.1} parent=1 // pred_region
      %1846 = vsyncadd [#allocation3], 0
      %s1848 = sshll.u32 [#allocation2], 4
      %s1849 = int_to_ptr.vmem [resolvable:$true] %s1848
      %s1850 = sshll.u32 %s5, 4
      %s1851 = int_to_ptr.hbm [resolvable:$true] %s1850
      %1853 = dma.vmem_to_hbm [thread:$0]  %s1849, 16, %s1851, [#allocation3]
    $region25: #{tpu_custom_call.1} parent=1 // pred_fallthru
      _
    // Predicated region
    $region26: #{tpu_custom_call.1} parent=1 // pred_check
      _
    $region27: #{tpu_custom_call.1} parent=1 // pred_check_branch
      %1855 = sbr.rel (0) target = $region29
    $region28: #{tpu_custom_call.1} parent=1 // pred_region
      %1857 = dma.done [#allocation3], 16
    $region29: #{tpu_custom_call.1} parent=1 // pred_fallthru
      _
    %1858 = vsyncpa [#allocation3], 1

</llo_original>
